<compile_context>
chip_gen: v5e
topology: v5e:2x2
jax: 0.10.0
libtpu: 0.0.40
codegen_flags: <defaults>
</compile_context>

<pallas_src>
import functools
import math

import jax
import jax.numpy as jnp
from jax.experimental import pallas as pl
from jax.experimental.pallas import tpu as pltpu

INPUT_SIZE = 768
H1 = 512
H2 = 256
OUTPUT = 128

_MIB = 1024 * 1024


def fcnet_kernel(x_ref, w1_ref, b1_ref, w2_ref, b2_ref, w3_ref, b3_ref, o_ref):
    # Entire hot path (3 matmuls + bias + ReLU) runs on the MXU/VPU in VMEM.
    # x arrives in its native dtype (usually f32) and is cast to bf16 here so
    # HBM sees a single read of x; accumulation/bias/ReLU stay in f32.
    x = x_ref[...].astype(jnp.bfloat16)
    h1 = jnp.dot(x, w1_ref[...], preferred_element_type=jnp.float32) + b1_ref[...]
    h1 = jnp.maximum(h1, 0.0).astype(jnp.bfloat16)
    h2 = jnp.dot(h1, w2_ref[...], preferred_element_type=jnp.float32) + b2_ref[...]
    h2 = jnp.maximum(h2, 0.0).astype(jnp.bfloat16)
    out = jnp.dot(h2, w3_ref[...], preferred_element_type=jnp.float32) + b3_ref[...]
    o_ref[...] = out.astype(o_ref.dtype)


def _round_up(n, m):
    return ((n + m - 1) // m) * m


def prepare_params(params):
    """Convert params once: bf16 weights, f32 (1, H) biases.  Call outside the hot loop."""
    w1, b1, w2, b2, w3, b3 = params
    cvt_w = lambda w: w.astype(jnp.bfloat16)
    cvt_b = lambda b: b.reshape(1, -1).astype(jnp.float32)
    return (cvt_w(w1), cvt_b(b1), cvt_w(w2), cvt_b(b2), cvt_w(w3), cvt_b(b3))


def _vmem_estimate_bytes(eff_block, x_itemsize, out_itemsize):
    # Double-buffered pipeline inputs/outputs + in-kernel intermediates.
    x_tile = eff_block * INPUT_SIZE * x_itemsize * 2
    weights = 2 * 2 * (INPUT_SIZE * H1 + H1 * H2 + H2 * OUTPUT)   # bf16, 2 buffers
    biases = 2 * 4 * (H1 + H2 + OUTPUT)
    out_tile = eff_block * OUTPUT * out_itemsize * 2
    interm = eff_block * (INPUT_SIZE * 2 + (H1 + H2) * 4)         # bf16 x + f32 h1/h2
    return x_tile + weights + biases + out_tile + interm


@functools.partial(jax.jit, static_argnames=("block_b",))
def fcnet_forward(x, params, block_b=512):
    """x: (B, 768).  params: output of prepare_params (or raw f32 params)."""
    w1, b1, w2, b2, w3, b3 = params
    B, D = x.shape
    assert D == INPUT_SIZE

    out_dtype = x.dtype

    # Fast path: params already pre-converted (no-op); otherwise convert at trace time.
    to_bf16 = lambda w: w if w.dtype == jnp.bfloat16 else w.astype(jnp.bfloat16)
    to_f32b = lambda b: b.reshape(1, -1).astype(jnp.float32)
    w1, w2, w3 = to_bf16(w1), to_bf16(w2), to_bf16(w3)
    b1, b2, b3 = to_f32b(b1), to_f32b(b2), to_f32b(b3)

    # Batch tile selection (all static / Python ints -- B is a trace-time shape):
    #  * clamp to round_up(B, 8) for tiny batches (sublane alignment),
    #  * cap at 4096,
    #  * v7x megacore: keep >= 2 grid steps for non-tiny batches so both TCs work.
    B8 = _round_up(B, 8)
    eff_block = min(min(block_b, 4096), B8)
    eff_block = max(8, _round_up(eff_block, 8))
    if B8 >= 256 and -(-B8 // eff_block) < 2:
        eff_block = max(128, _round_up(-(-B8 // 2), 128))
    eff_block = min(eff_block, _round_up(B8, 8))

    # Ragged grid: no jnp.pad -- Pallas masks the partial last block's writeback.
    # Safe because each output row depends solely on its own input row.
    grid = (pl.cdiv(B, eff_block),)

    # Weights/biases are fully VMEM-resident (~1.1 MiB bf16); only the batch
    # dimension is tiled across the grid.
    full = lambda shape: pl.BlockSpec(shape, lambda i: (0,) * len(shape))

    flops = 2 * B * (INPUT_SIZE * H1 + H1 * H2 + H2 * OUTPUT)
    bytes_accessed = (
        B * INPUT_SIZE * x.dtype.itemsize
        + (w1.size + w2.size + w3.size) * 2
        + (b1.size + b2.size + b3.size) * 4
        + B * OUTPUT * jnp.dtype(out_dtype).itemsize
    )

    vmem_limit = int(
        min(60 * _MIB,
            max(32 * _MIB,
                1.5 * _vmem_estimate_bytes(eff_block, x.dtype.itemsize,
                                           jnp.dtype(out_dtype).itemsize)))
    )

    out = pl.pallas_call(
        fcnet_kernel,
        out_shape=jax.ShapeDtypeStruct((B, OUTPUT), out_dtype),
        grid_spec=pltpu.PrefetchScalarGridSpec(
            num_scalar_prefetch=0,
            grid=grid,
            in_specs=[
                pl.BlockSpec((eff_block, INPUT_SIZE), lambda i: (i, 0)),
                full((INPUT_SIZE, H1)),
                full((1, H1)),
                full((H1, H2)),
                full((1, H2)),
                full((H2, OUTPUT)),
                full((1, OUTPUT)),
            ],
            out_specs=pl.BlockSpec((eff_block, OUTPUT), lambda i: (i, 0)),
        ),
        compiler_params=pltpu.CompilerParams(
            dimension_semantics=("parallel",),
            vmem_limit_bytes=vmem_limit,
        ),
        cost_estimate=pl.CostEstimate(
            flops=flops, transcendentals=0, bytes_accessed=bytes_accessed
        ),
    )(x, w1, b1, w2, b2, w3, b3)

    return out


def init_linear(key, fan_in, fan_out, dtype=jnp.float32):
    # Matches nn.Linear default init: U(-1/sqrt(fan_in), 1/sqrt(fan_in)).
    kw, kb = jax.random.split(key)
    bound = 1.0 / math.sqrt(fan_in)
    # Stored as (fan_in, fan_out) so the kernel does x @ W.
    w = jax.random.uniform(kw, (fan_in, fan_out), dtype, minval=-bound, maxval=bound)
    b = jax.random.uniform(kb, (1, fan_out), dtype, minval=-bound, maxval=bound)
    return w, b


def reference_forward_f32(x, params):
    # Pure f32 reference matching the PyTorch module's math.
    w1, b1, w2, b2, w3, b3 = params
    h1 = jnp.maximum(x @ w1 + b1, 0.0)
    h2 = jnp.maximum(h1 @ w2 + b2, 0.0)
    return h2 @ w3 + b3


def reference_forward_bf16(x, params):
    # Mirrors the kernel's precision: bf16 matmul operands, f32 accumulate.
    w1, b1, w2, b2, w3, b3 = params
    xb = x.astype(jnp.bfloat16)
    h1 = jnp.dot(xb, w1.astype(jnp.bfloat16), preferred_element_type=jnp.float32) + b1
    h1 = jnp.maximum(h1, 0.0).astype(jnp.bfloat16)
    h2 = jnp.dot(h1, w2.astype(jnp.bfloat16), preferred_element_type=jnp.float32) + b2
    h2 = jnp.maximum(h2, 0.0).astype(jnp.bfloat16)
    return jnp.dot(h2, w3.astype(jnp.bfloat16), preferred_element_type=jnp.float32) + b3


if __name__ == "__main__":
    key = jax.random.PRNGKey(0)
    kx, k1, k2, k3 = jax.random.split(key, 4)

    w1, b1 = init_linear(k1, INPUT_SIZE, H1)
    w2, b2 = init_linear(k2, H1, H2)
    w3, b3 = init_linear(k3, H2, OUTPUT)
    raw_params = (w1, b1, w2, b2, w3, b3)
    params = prepare_params(raw_params)  # one-time conversion (bf16 W, f32 b)

    # Case 1: small batch (multiple of 8) -> clamped tile, single grid step.
    B = 16
    x = jax.random.normal(kx, (B, INPUT_SIZE), jnp.float32)
    out = jax.block_until_ready(fcnet_forward(x, params))

    ref32 = jax.block_until_ready(reference_forward_f32(x, raw_params))
    ref16 = jax.block_until_ready(reference_forward_bf16(x, raw_params))
    assert out.shape == (B, OUTPUT)
    # Loose check vs. full-f32 PyTorch semantics (bf16 operand quantization).
    assert jnp.allclose(out, ref32, atol=5e-2, rtol=5e-2)
    # Tight check vs. a reference using the kernel's exact precision recipe.
    assert jnp.allclose(out, ref16, atol=2e-2, rtol=2e-2)

    # Case 2: ragged batch (not a multiple of 8) -> masked partial last block,
    # no host-side padding copy.
    B2 = 10
    x2 = x[:B2]
    out2 = jax.block_until_ready(fcnet_forward(x2, params))
    assert out2.shape == (B2, OUTPUT)
    assert jnp.allclose(out2, ref32[:B2], atol=5e-2, rtol=5e-2)
    assert jnp.allclose(out2, ref16[:B2], atol=2e-2, rtol=2e-2)

    print("KERNEL_OK")
</pallas_src>

<mosaic_0001>
module attributes {stable_mosaic.version = 11 : i64} {
  func.func @fcnet_kernel(%arg0: i32, %arg1: memref<16x768xf32, #tpu.memory_space<vmem>>, %arg2: memref<768x512xbf16, #tpu.memory_space<vmem>>, %arg3: memref<1x512xf32, #tpu.memory_space<vmem>>, %arg4: memref<512x256xbf16, #tpu.memory_space<vmem>>, %arg5: memref<1x256xf32, #tpu.memory_space<vmem>>, %arg6: memref<256x128xbf16, #tpu.memory_space<vmem>>, %arg7: memref<1x128xf32, #tpu.memory_space<vmem>>, %arg8: memref<16x128xf32, #tpu.memory_space<vmem>>) attributes {dimension_semantics = [#tpu.dimension_semantics<parallel>], iteration_bounds = array<i64: 1>, scalar_prefetch = 0 : i64, scratch_operands = 0 : i64, tpu.core_type = #tpu.core_type<tc>, window_params = [{transform_indices = @transform_0, window_bounds = array<i64: 16, 768>}, {pipeline_mode = #tpu.pipeline_mode<synchronous>, transform_indices = @transform_1, window_bounds = array<i64: 768, 512>}, {pipeline_mode = #tpu.pipeline_mode<synchronous>, transform_indices = @transform_2, window_bounds = array<i64: 1, 512>}, {pipeline_mode = #tpu.pipeline_mode<synchronous>, transform_indices = @transform_3, window_bounds = array<i64: 512, 256>}, {pipeline_mode = #tpu.pipeline_mode<synchronous>, transform_indices = @transform_4, window_bounds = array<i64: 1, 256>}, {pipeline_mode = #tpu.pipeline_mode<synchronous>, transform_indices = @transform_5, window_bounds = array<i64: 256, 128>}, {pipeline_mode = #tpu.pipeline_mode<synchronous>, transform_indices = @transform_6, window_bounds = array<i64: 1, 128>}, {transform_indices = @transform_7, window_bounds = array<i64: 16, 128>}]} {
    %c0 = arith.constant 0 : index
    %c0_0 = arith.constant 0 : index
    %0 = vector.load %arg1[%c0, %c0_0] : memref<16x768xf32, #tpu.memory_space<vmem>>, vector<16x768xf32>
    %1 = arith.truncf %0 : vector<16x768xf32> to vector<16x768xbf16>
    %c0_1 = arith.constant 0 : index
    %c0_2 = arith.constant 0 : index
    %2 = vector.load %arg2[%c0_1, %c0_2] : memref<768x512xbf16, #tpu.memory_space<vmem>>, vector<768x512xbf16>
    %cst = arith.constant dense<0.000000e+00> : vector<16x512xf32>
    %3 = tpu.matmul %1, %2, %cst {dimension_numbers = #tpu.dot_dimension_numbers<[1], [0], [0], [1], [0, 0, 1, 1], [], []>} : vector<16x768xbf16>, vector<768x512xbf16>, vector<16x512xf32> -> vector<16x512xf32>
    %c0_3 = arith.constant 0 : index
    %c0_4 = arith.constant 0 : index
    %4 = vector.load %arg3[%c0_3, %c0_4] : memref<1x512xf32, #tpu.memory_space<vmem>>, vector<1x512xf32>
    %5 = vector.broadcast %4 : vector<1x512xf32> to vector<16x512xf32>
    %6 = arith.addf %3, %5 : vector<16x512xf32>
    %cst_5 = arith.constant 0.000000e+00 : f32
    %7 = vector.broadcast %cst_5 : f32 to vector<16x512xf32>
    %8 = arith.maximumf %6, %7 : vector<16x512xf32>
    %9 = arith.truncf %8 : vector<16x512xf32> to vector<16x512xbf16>
    %c0_6 = arith.constant 0 : index
    %c0_7 = arith.constant 0 : index
    %10 = vector.load %arg4[%c0_6, %c0_7] : memref<512x256xbf16, #tpu.memory_space<vmem>>, vector<512x256xbf16>
    %cst_8 = arith.constant dense<0.000000e+00> : vector<16x256xf32>
    %11 = tpu.matmul %9, %10, %cst_8 {dimension_numbers = #tpu.dot_dimension_numbers<[1], [0], [0], [1], [0, 0, 1, 1], [], []>} : vector<16x512xbf16>, vector<512x256xbf16>, vector<16x256xf32> -> vector<16x256xf32>
    %c0_9 = arith.constant 0 : index
    %c0_10 = arith.constant 0 : index
    %12 = vector.load %arg5[%c0_9, %c0_10] : memref<1x256xf32, #tpu.memory_space<vmem>>, vector<1x256xf32>
    %13 = vector.broadcast %12 : vector<1x256xf32> to vector<16x256xf32>
    %14 = arith.addf %11, %13 : vector<16x256xf32>
    %cst_11 = arith.constant 0.000000e+00 : f32
    %15 = vector.broadcast %cst_11 : f32 to vector<16x256xf32>
    %16 = arith.maximumf %14, %15 : vector<16x256xf32>
    %17 = arith.truncf %16 : vector<16x256xf32> to vector<16x256xbf16>
    %c0_12 = arith.constant 0 : index
    %c0_13 = arith.constant 0 : index
    %18 = vector.load %arg6[%c0_12, %c0_13] : memref<256x128xbf16, #tpu.memory_space<vmem>>, vector<256x128xbf16>
    %cst_14 = arith.constant dense<0.000000e+00> : vector<16x128xf32>
    %19 = tpu.matmul %17, %18, %cst_14 {dimension_numbers = #tpu.dot_dimension_numbers<[1], [0], [0], [1], [0, 0, 1, 1], [], []>} : vector<16x256xbf16>, vector<256x128xbf16>, vector<16x128xf32> -> vector<16x128xf32>
    %c0_15 = arith.constant 0 : index
    %c0_16 = arith.constant 0 : index
    %20 = vector.load %arg7[%c0_15, %c0_16] : memref<1x128xf32, #tpu.memory_space<vmem>>, vector<1x128xf32>
    %21 = vector.broadcast %20 : vector<1x128xf32> to vector<16x128xf32>
    %22 = arith.addf %19, %21 : vector<16x128xf32>
    %c0_17 = arith.constant 0 : index
    %c0_18 = arith.constant 0 : index
    %23 = vector.load %arg8[%c0_17, %c0_18] : memref<16x128xf32, #tpu.memory_space<vmem>>, vector<16x128xf32>
    tpu.vector_store %arg8[%c0_17, %c0_18], %22 {strides = array<i32>} : memref<16x128xf32, #tpu.memory_space<vmem>>, vector<16x128xf32>,
    return
  }
  func.func @transform_0(%arg0: i32) -> (i32, i32) {
    %c0_i32 = arith.constant 0 : i32
    %c0_i32_0 = arith.constant 0 : i32
    return %arg0, %c0_i32 : i32, i32
  }
  func.func @transform_1(%arg0: i32) -> (i32, i32) {
    %c0_i32 = arith.constant 0 : i32
    %c0_i32_0 = arith.constant 0 : i32
    %c0_i32_1 = arith.constant 0 : i32
    return %c0_i32, %c0_i32_0 : i32, i32
  }
  func.func @transform_2(%arg0: i32) -> (i32, i32) {
    %c0_i32 = arith.constant 0 : i32
    %c0_i32_0 = arith.constant 0 : i32
    %c0_i32_1 = arith.constant 0 : i32
    return %c0_i32, %c0_i32_0 : i32, i32
  }
  func.func @transform_3(%arg0: i32) -> (i32, i32) {
    %c0_i32 = arith.constant 0 : i32
    %c0_i32_0 = arith.constant 0 : i32
    %c0_i32_1 = arith.constant 0 : i32
    return %c0_i32, %c0_i32_0 : i32, i32
  }
  func.func @transform_4(%arg0: i32) -> (i32, i32) {
    %c0_i32 = arith.constant 0 : i32
    %c0_i32_0 = arith.constant 0 : i32
    %c0_i32_1 = arith.constant 0 : i32
    return %c0_i32, %c0_i32_0 : i32, i32
  }
  func.func @transform_5(%arg0: i32) -> (i32, i32) {
    %c0_i32 = arith.constant 0 : i32
    %c0_i32_0 = arith.constant 0 : i32
    %c0_i32_1 = arith.constant 0 : i32
    return %c0_i32, %c0_i32_0 : i32, i32
  }
  func.func @transform_6(%arg0: i32) -> (i32, i32) {
    %c0_i32 = arith.constant 0 : i32
    %c0_i32_0 = arith.constant 0 : i32
    %c0_i32_1 = arith.constant 0 : i32
    return %c0_i32, %c0_i32_0 : i32, i32
  }
  func.func @transform_7(%arg0: i32) -> (i32, i32) {
    %c0_i32 = arith.constant 0 : i32
    %c0_i32_0 = arith.constant 0 : i32
    return %arg0, %c0_i32 : i32, i32
  }
}

</mosaic_0001>

<llo_original>
// kernel: fcnet_forward.1
$region0: #{fcnet_forward.1}
  #allocation0 [shape = 'u32[]', space=smem, size = 0x4, offset = 0x4, fixed_abs, tag = 'smem constant byte address 0x4 - core index']
  #allocation1 [shape = 'u32[72,128]{1,0:T(1,128)}', space=vmem, size = 0x9000, scoped, tag = 'internal scratch']
  %s0 = inlined_call_operand.hbm [shape: f32[16,768], index: 0, kind: input, shape index: {}]
  %s1 = inlined_call_operand.hbm [shape: bf16[768,512], index: 1, kind: input, shape index: {}]
  %s2 = inlined_call_operand.hbm [shape: f32[1,512], index: 2, kind: input, shape index: {}]
  %s3 = inlined_call_operand.hbm [shape: bf16[512,256], index: 3, kind: input, shape index: {}]
  %s4 = inlined_call_operand.vmem [shape: f32[1,256], index: 4, kind: input, shape index: {}]
  %s5 = inlined_call_operand.hbm [shape: bf16[256,128], index: 5, kind: input, shape index: {}]
  %s6 = inlined_call_operand.vmem [shape: f32[1,128], index: 6, kind: input, shape index: {}]
  %s7 = inlined_call_operand.hbm [shape: f32[16,128], index: 7, kind: output, shape index: {}]
  %s8 = sld [smem:[#allocation0]]
  $region58: #{fcnet_forward.1} parent=0
    _
  %s10 = ssub.s32 1, %s8
  %s11 = scalar_select 0, %s10, %s8
  $region1: #{fcnet_forward.1} parent=0
    #allocation2 [shape = 'u8[49152]{0}', space=vmem, size = 0xc000, scoped, tag = 'input window, operand 0, single buffered']
    #allocation3 [shape = 's32[1]{0}', space=sflag, size = 0x4, scoped, tag = 'scoped memory for fcnet_forward.1']
    #allocation4 [shape = 's32[1]{0}', space=sflag, size = 0x4, scoped, tag = 'scoped memory for fcnet_forward.1']
    #allocation5 [shape = 'u8[786432]{0}', space=vmem, size = 0xc0000, scoped, tag = 'input window, operand 1, single buffered']
    #allocation6 [shape = 's32[1]{0}', space=sflag, size = 0x4, scoped, tag = 'scoped memory for fcnet_forward.1']
    #allocation7 [shape = 'u8[2048]{0}', space=vmem, size = 0x800, scoped, tag = 'input window, operand 2, single buffered']
    #allocation8 [shape = 'u8[262144]{0}', space=vmem, size = 0x40000, scoped, tag = 'input window, operand 3, single buffered']
    #allocation9 [shape = 's32[1]{0}', space=sflag, size = 0x4, scoped, tag = 'scoped memory for fcnet_forward.1']
    #allocation10 [shape = 'u8[65536]{0}', space=vmem, size = 0x10000, scoped, tag = 'input window, operand 5, single buffered']
    #allocation11 [shape = 'u8[8192]{0}', space=vmem, size = 0x2000, scoped, tag = 'output window, operand 0, single buffered']
    %12 = vsyncpa [#allocation3], 0
    %13 = vsyncpa [#allocation6], 0
    %14 = vsyncpa [#allocation9], 0
    %15 = vsyncpa [#allocation4], 0
    // Predicated region
    $region2: #{fcnet_forward.1} parent=1 // pred_check
      _
    $region3: #{fcnet_forward.1} parent=1 // pred_check_branch
      %17 = sbr.rel (0) target = $region5
    $region4: #{fcnet_forward.1} parent=1 // pred_region
      %19 = vsyncadd [#allocation3], 0
      %s20 = sshll.u32 %s0, 4
      %s21 = int_to_ptr.hbm [resolvable:$true] %s20
      %s22 = sshll.u32 [#allocation2], 4
      %s23 = int_to_ptr.vmem [resolvable:$true] %s22
      %28 = dma.hbm_to_vmem [thread:$0]  %s21, 1536, %s23, [#allocation3], 768, 768, 48
    $region5: #{fcnet_forward.1} parent=1 // pred_fallthru
      _
    // Predicated region
    $region6: #{fcnet_forward.1} parent=1 // pred_check
      _
    $region7: #{fcnet_forward.1} parent=1 // pred_check_branch
      %30 = sbr.rel (0) target = $region9
    $region8: #{fcnet_forward.1} parent=1 // pred_region
      %32 = vsyncadd [#allocation6], 0
      %s33 = sshll.u32 %s1, 4
      %s34 = int_to_ptr.hbm [resolvable:$true] %s33
      %s35 = sshll.u32 [#allocation5], 4
      %s36 = int_to_ptr.vmem [resolvable:$true] %s35
      %41 = dma.hbm_to_vmem [thread:$0]  %s34, 24576, %s36, [#allocation6], 256, 256, 16
    $region9: #{fcnet_forward.1} parent=1 // pred_fallthru
      _
    // Predicated region
    $region10: #{fcnet_forward.1} parent=1 // pred_check
      _
    $region11: #{fcnet_forward.1} parent=1 // pred_check_branch
      %43 = sbr.rel (0) target = $region13
    $region12: #{fcnet_forward.1} parent=1 // pred_region
      %45 = vsyncadd [#allocation6], 0
      %s47 = sshll.u32 %s2, 4
      %s48 = int_to_ptr.hbm [resolvable:$true] %s47
      %s49 = sshll.u32 [#allocation7], 4
      %s50 = int_to_ptr.vmem [resolvable:$true] %s49
      %52 = dma.hbm_to_vmem [thread:$0]  %s48, 64, %s50, [#allocation6]
    $region13: #{fcnet_forward.1} parent=1 // pred_fallthru
      _
    // Predicated region
    $region14: #{fcnet_forward.1} parent=1 // pred_check
      _
    $region15: #{fcnet_forward.1} parent=1 // pred_check_branch
      %54 = sbr.rel (0) target = $region17
    $region16: #{fcnet_forward.1} parent=1 // pred_region
      %56 = vsyncadd [#allocation9], 0
      %s57 = sshll.u32 %s3, 4
      %s58 = int_to_ptr.hbm [resolvable:$true] %s57
      %s59 = sshll.u32 [#allocation8], 4
      %s60 = int_to_ptr.vmem [resolvable:$true] %s59
      %65 = dma.hbm_to_vmem [thread:$0]  %s58, 8192, %s60, [#allocation9], 128, 128, 8
    $region17: #{fcnet_forward.1} parent=1 // pred_fallthru
      _
    // Predicated region
    $region18: #{fcnet_forward.1} parent=1 // pred_check
      _
    $region19: #{fcnet_forward.1} parent=1 // pred_check_branch
      %67 = sbr.rel (0) target = $region21
    $region20: #{fcnet_forward.1} parent=1 // pred_region
      _
    $region21: #{fcnet_forward.1} parent=1 // pred_fallthru
      _
    // Predicated region
    $region22: #{fcnet_forward.1} parent=1 // pred_check
      _
    $region23: #{fcnet_forward.1} parent=1 // pred_check_branch
      %69 = sbr.rel (0) target = $region25
    $region24: #{fcnet_forward.1} parent=1 // pred_region
      %71 = vsyncadd [#allocation9], 0
      %s72 = sshll.u32 %s5, 4
      %s73 = int_to_ptr.hbm [resolvable:$true] %s72
      %s74 = sshll.u32 [#allocation10], 4
      %s75 = int_to_ptr.vmem [resolvable:$true] %s74
      %80 = dma.hbm_to_vmem [thread:$0]  %s73, 2048, %s75, [#allocation9], 64, 64, 4
    $region25: #{fcnet_forward.1} parent=1 // pred_fallthru
      _
    // Predicated region
    $region26: #{fcnet_forward.1} parent=1 // pred_check
      _
    $region27: #{fcnet_forward.1} parent=1 // pred_check_branch
      %82 = sbr.rel (0) target = $region29
    $region28: #{fcnet_forward.1} parent=1 // pred_region
      _
    $region29: #{fcnet_forward.1} parent=1 // pred_fallthru
      _
    // Predicated region
    $region30: #{fcnet_forward.1} parent=1 // pred_check
      _
    $region31: #{fcnet_forward.1} parent=1 // pred_check_branch
      %84 = sbr.rel (0) target = $region33
    $region32: #{fcnet_forward.1} parent=1 // pred_region
      %86 = dma.done [#allocation3], 1536
    $region33: #{fcnet_forward.1} parent=1 // pred_fallthru
      _
    // Predicated region
    $region34: #{fcnet_forward.1} parent=1 // pred_check
      _
    $region35: #{fcnet_forward.1} parent=1 // pred_check_branch
      %88 = sbr.rel (0) target = $region37
    $region36: #{fcnet_forward.1} parent=1 // pred_region
      %90 = dma.done [#allocation6], 24576
    $region37: #{fcnet_forward.1} parent=1 // pred_fallthru
      _
    // Predicated region
    $region38: #{fcnet_forward.1} parent=1 // pred_check
      _
    $region39: #{fcnet_forward.1} parent=1 // pred_check_branch
      %92 = sbr.rel (0) target = $region41
    $region40: #{fcnet_forward.1} parent=1 // pred_region
      %94 = dma.done [#allocation6], 64
    $region41: #{fcnet_forward.1} parent=1 // pred_fallthru
      _
    // Predicated region
    $region42: #{fcnet_forward.1} parent=1 // pred_check
      _
    $region43: #{fcnet_forward.1} parent=1 // pred_check_branch
      %96 = sbr.rel (0) target = $region45
    $region44: #{fcnet_forward.1} parent=1 // pred_region
      %98 = dma.done [#allocation9], 8192
    $region45: #{fcnet_forward.1} parent=1 // pred_fallthru
      _
    // Predicated region
    $region46: #{fcnet_forward.1} parent=1 // pred_check
      _
    $region47: #{fcnet_forward.1} parent=1 // pred_check_branch
      %100 = sbr.rel (0) target = $region49
    $region48: #{fcnet_forward.1} parent=1 // pred_region
      %102 = dma.done [#allocation9], 2048
    $region49: #{fcnet_forward.1} parent=1 // pred_fallthru
      _
    %v103 = vld [vmem:[#allocation2] sm:$0xff]
    %v104 = vld [vmem:[#allocation2 + $0x8] sm:$0xff]
    %v105 = vld [vmem:[#allocation2 + $0x10] sm:$0xff]
    %v106 = vld [vmem:[#allocation2 + $0x18] sm:$0xff]
    %v107 = vld [vmem:[#allocation2 + $0x20] sm:$0xff]
    %v108 = vld [vmem:[#allocation2 + $0x28] sm:$0xff]
    %v109 = vld [vmem:[#allocation2 + $0x30] sm:$0xff]
    %v110 = vld [vmem:[#allocation2 + $0x38] sm:$0xff]
    %v111 = vld [vmem:[#allocation2 + $0x40] sm:$0xff]
    %v112 = vld [vmem:[#allocation2 + $0x48] sm:$0xff]
    %v113 = vld [vmem:[#allocation2 + $0x50] sm:$0xff]
    %v114 = vld [vmem:[#allocation2 + $0x58] sm:$0xff]
    %v115 = vpack.c.bf16 %v109, %v103
    %v116 = vpack.c.bf16 %v110, %v104
    %v117 = vpack.c.bf16 %v111, %v105
    %v118 = vpack.c.bf16 %v112, %v106
    %v119 = vpack.c.bf16 %v113, %v107
    %v120 = vpack.c.bf16 %v114, %v108
    %v121 = vld [vmem:[#allocation5] sm:$0xff]
    %v122 = vld [vmem:[#allocation5 + $0x8] sm:$0xff]
    %v123 = vld [vmem:[#allocation5 + $0x10] sm:$0xff]
    %v124 = vld [vmem:[#allocation5 + $0x18] sm:$0xff]
    %v125 = vld [vmem:[#allocation5 + $0x20] sm:$0xff]
    %v126 = vld [vmem:[#allocation5 + $0x28] sm:$0xff]
    %v127 = vld [vmem:[#allocation5 + $0x30] sm:$0xff]
    %v128 = vld [vmem:[#allocation5 + $0x38] sm:$0xff]
    %v129 = vld [vmem:[#allocation5 + $0x40] sm:$0xff]
    %v130 = vld [vmem:[#allocation5 + $0x48] sm:$0xff]
    %v131 = vld [vmem:[#allocation5 + $0x50] sm:$0xff]
    %v132 = vld [vmem:[#allocation5 + $0x58] sm:$0xff]
    %v133 = vld [vmem:[#allocation5 + $0x60] sm:$0xff]
    %v134 = vld [vmem:[#allocation5 + $0x68] sm:$0xff]
    %v135 = vld [vmem:[#allocation5 + $0x70] sm:$0xff]
    %v136 = vld [vmem:[#allocation5 + $0x78] sm:$0xff]
    %v137 = vld [vmem:[#allocation5 + $0x80] sm:$0xff]
    %v138 = vld [vmem:[#allocation5 + $0x88] sm:$0xff]
    %v139 = vld [vmem:[#allocation5 + $0x90] sm:$0xff]
    %v140 = vld [vmem:[#allocation5 + $0x98] sm:$0xff]
    %v141 = vld [vmem:[#allocation5 + $0xa0] sm:$0xff]
    %v142 = vld [vmem:[#allocation5 + $0xa8] sm:$0xff]
    %v143 = vld [vmem:[#allocation5 + $0xb0] sm:$0xff]
    %v144 = vld [vmem:[#allocation5 + $0xb8] sm:$0xff]
    %v145 = vld [vmem:[#allocation5 + $0xc0] sm:$0xff]
    %v146 = vld [vmem:[#allocation5 + $0xc8] sm:$0xff]
    %v147 = vld [vmem:[#allocation5 + $0xd0] sm:$0xff]
    %v148 = vld [vmem:[#allocation5 + $0xd8] sm:$0xff]
    %v149 = vld [vmem:[#allocation5 + $0xe0] sm:$0xff]
    %v150 = vld [vmem:[#allocation5 + $0xe8] sm:$0xff]
    %v151 = vld [vmem:[#allocation5 + $0xf0] sm:$0xff]
    %v152 = vld [vmem:[#allocation5 + $0xf8] sm:$0xff]
    %v153 = vld [vmem:[#allocation5 + $0x100] sm:$0xff]
    %v154 = vld [vmem:[#allocation5 + $0x108] sm:$0xff]
    %v155 = vld [vmem:[#allocation5 + $0x110] sm:$0xff]
    %v156 = vld [vmem:[#allocation5 + $0x118] sm:$0xff]
    %v157 = vld [vmem:[#allocation5 + $0x120] sm:$0xff]
    %v158 = vld [vmem:[#allocation5 + $0x128] sm:$0xff]
    %v159 = vld [vmem:[#allocation5 + $0x130] sm:$0xff]
    %v160 = vld [vmem:[#allocation5 + $0x138] sm:$0xff]
    %v161 = vld [vmem:[#allocation5 + $0x140] sm:$0xff]
    %v162 = vld [vmem:[#allocation5 + $0x148] sm:$0xff]
    %v163 = vld [vmem:[#allocation5 + $0x150] sm:$0xff]
    %v164 = vld [vmem:[#allocation5 + $0x158] sm:$0xff]
    %v165 = vld [vmem:[#allocation5 + $0x160] sm:$0xff]
    %v166 = vld [vmem:[#allocation5 + $0x168] sm:$0xff]
    %v167 = vld [vmem:[#allocation5 + $0x170] sm:$0xff]
    %v168 = vld [vmem:[#allocation5 + $0x178] sm:$0xff]
    %v169 = vld [vmem:[#allocation5 + $0x180] sm:$0xff]
    %v170 = vld [vmem:[#allocation5 + $0x188] sm:$0xff]
    %v171 = vld [vmem:[#allocation5 + $0x190] sm:$0xff]
    %v172 = vld [vmem:[#allocation5 + $0x198] sm:$0xff]
    %v173 = vld [vmem:[#allocation5 + $0x1a0] sm:$0xff]
    %v174 = vld [vmem:[#allocation5 + $0x1a8] sm:$0xff]
    %v175 = vld [vmem:[#allocation5 + $0x1b0] sm:$0xff]
    %v176 = vld [vmem:[#allocation5 + $0x1b8] sm:$0xff]
    %v177 = vld [vmem:[#allocation5 + $0x1c0] sm:$0xff]
    %v178 = vld [vmem:[#allocation5 + $0x1c8] sm:$0xff]
    %v179 = vld [vmem:[#allocation5 + $0x1d0] sm:$0xff]
    %v180 = vld [vmem:[#allocation5 + $0x1d8] sm:$0xff]
    %v181 = vld [vmem:[#allocation5 + $0x1e0] sm:$0xff]
    %v182 = vld [vmem:[#allocation5 + $0x1e8] sm:$0xff]
    %v183 = vld [vmem:[#allocation5 + $0x1f0] sm:$0xff]
    %v184 = vld [vmem:[#allocation5 + $0x1f8] sm:$0xff]
    %v185 = vld [vmem:[#allocation5 + $0x200] sm:$0xff]
    %v186 = vld [vmem:[#allocation5 + $0x208] sm:$0xff]
    %v187 = vld [vmem:[#allocation5 + $0x210] sm:$0xff]
    %v188 = vld [vmem:[#allocation5 + $0x218] sm:$0xff]
    %v189 = vld [vmem:[#allocation5 + $0x220] sm:$0xff]
    %v190 = vld [vmem:[#allocation5 + $0x228] sm:$0xff]
    %v191 = vld [vmem:[#allocation5 + $0x230] sm:$0xff]
    %v192 = vld [vmem:[#allocation5 + $0x238] sm:$0xff]
    %v193 = vld [vmem:[#allocation5 + $0x240] sm:$0xff]
    %v194 = vld [vmem:[#allocation5 + $0x248] sm:$0xff]
    %v195 = vld [vmem:[#allocation5 + $0x250] sm:$0xff]
    %v196 = vld [vmem:[#allocation5 + $0x258] sm:$0xff]
    %v197 = vld [vmem:[#allocation5 + $0x260] sm:$0xff]
    %v198 = vld [vmem:[#allocation5 + $0x268] sm:$0xff]
    %v199 = vld [vmem:[#allocation5 + $0x270] sm:$0xff]
    %v200 = vld [vmem:[#allocation5 + $0x278] sm:$0xff]
    %v201 = vld [vmem:[#allocation5 + $0x280] sm:$0xff]
    %v202 = vld [vmem:[#allocation5 + $0x288] sm:$0xff]
    %v203 = vld [vmem:[#allocation5 + $0x290] sm:$0xff]
    %v204 = vld [vmem:[#allocation5 + $0x298] sm:$0xff]
    %v205 = vld [vmem:[#allocation5 + $0x2a0] sm:$0xff]
    %v206 = vld [vmem:[#allocation5 + $0x2a8] sm:$0xff]
    %v207 = vld [vmem:[#allocation5 + $0x2b0] sm:$0xff]
    %v208 = vld [vmem:[#allocation5 + $0x2b8] sm:$0xff]
    %v209 = vld [vmem:[#allocation5 + $0x2c0] sm:$0xff]
    %v210 = vld [vmem:[#allocation5 + $0x2c8] sm:$0xff]
    %v211 = vld [vmem:[#allocation5 + $0x2d0] sm:$0xff]
    %v212 = vld [vmem:[#allocation5 + $0x2d8] sm:$0xff]
    %v213 = vld [vmem:[#allocation5 + $0x2e0] sm:$0xff]
    %v214 = vld [vmem:[#allocation5 + $0x2e8] sm:$0xff]
    %v215 = vld [vmem:[#allocation5 + $0x2f0] sm:$0xff]
    %v216 = vld [vmem:[#allocation5 + $0x2f8] sm:$0xff]
    %v217 = vld [vmem:[#allocation5 + $0x300] sm:$0xff]
    %v218 = vld [vmem:[#allocation5 + $0x308] sm:$0xff]
    %v219 = vld [vmem:[#allocation5 + $0x310] sm:$0xff]
    %v220 = vld [vmem:[#allocation5 + $0x318] sm:$0xff]
    %v221 = vld [vmem:[#allocation5 + $0x320] sm:$0xff]
    %v222 = vld [vmem:[#allocation5 + $0x328] sm:$0xff]
    %v223 = vld [vmem:[#allocation5 + $0x330] sm:$0xff]
    %v224 = vld [vmem:[#allocation5 + $0x338] sm:$0xff]
    %v225 = vld [vmem:[#allocation5 + $0x340] sm:$0xff]
    %v226 = vld [vmem:[#allocation5 + $0x348] sm:$0xff]
    %v227 = vld [vmem:[#allocation5 + $0x350] sm:$0xff]
    %v228 = vld [vmem:[#allocation5 + $0x358] sm:$0xff]
    %v229 = vld [vmem:[#allocation5 + $0x360] sm:$0xff]
    %v230 = vld [vmem:[#allocation5 + $0x368] sm:$0xff]
    %v231 = vld [vmem:[#allocation5 + $0x370] sm:$0xff]
    %v232 = vld [vmem:[#allocation5 + $0x378] sm:$0xff]
    %v233 = vld [vmem:[#allocation5 + $0x380] sm:$0xff]
    %v234 = vld [vmem:[#allocation5 + $0x388] sm:$0xff]
    %v235 = vld [vmem:[#allocation5 + $0x390] sm:$0xff]
    %v236 = vld [vmem:[#allocation5 + $0x398] sm:$0xff]
    %v237 = vld [vmem:[#allocation5 + $0x3a0] sm:$0xff]
    %v238 = vld [vmem:[#allocation5 + $0x3a8] sm:$0xff]
    %v239 = vld [vmem:[#allocation5 + $0x3b0] sm:$0xff]
    %v240 = vld [vmem:[#allocation5 + $0x3b8] sm:$0xff]
    %v241 = vld [vmem:[#allocation5 + $0x3c0] sm:$0xff]
    %v242 = vld [vmem:[#allocation5 + $0x3c8] sm:$0xff]
    %v243 = vld [vmem:[#allocation5 + $0x3d0] sm:$0xff]
    %v244 = vld [vmem:[#allocation5 + $0x3d8] sm:$0xff]
    %v245 = vld [vmem:[#allocation5 + $0x3e0] sm:$0xff]
    %v246 = vld [vmem:[#allocation5 + $0x3e8] sm:$0xff]
    %v247 = vld [vmem:[#allocation5 + $0x3f0] sm:$0xff]
    %v248 = vld [vmem:[#allocation5 + $0x3f8] sm:$0xff]
    %v249 = vld [vmem:[#allocation5 + $0x400] sm:$0xff]
    %v250 = vld [vmem:[#allocation5 + $0x408] sm:$0xff]
    %v251 = vld [vmem:[#allocation5 + $0x410] sm:$0xff]
    %v252 = vld [vmem:[#allocation5 + $0x418] sm:$0xff]
    %v253 = vld [vmem:[#allocation5 + $0x420] sm:$0xff]
    %v254 = vld [vmem:[#allocation5 + $0x428] sm:$0xff]
    %v255 = vld [vmem:[#allocation5 + $0x430] sm:$0xff]
    %v256 = vld [vmem:[#allocation5 + $0x438] sm:$0xff]
    %v257 = vld [vmem:[#allocation5 + $0x440] sm:$0xff]
    %v258 = vld [vmem:[#allocation5 + $0x448] sm:$0xff]
    %v259 = vld [vmem:[#allocation5 + $0x450] sm:$0xff]
    %v260 = vld [vmem:[#allocation5 + $0x458] sm:$0xff]
    %v261 = vld [vmem:[#allocation5 + $0x460] sm:$0xff]
    %v262 = vld [vmem:[#allocation5 + $0x468] sm:$0xff]
    %v263 = vld [vmem:[#allocation5 + $0x470] sm:$0xff]
    %v264 = vld [vmem:[#allocation5 + $0x478] sm:$0xff]
    %v265 = vld [vmem:[#allocation5 + $0x480] sm:$0xff]
    %v266 = vld [vmem:[#allocation5 + $0x488] sm:$0xff]
    %v267 = vld [vmem:[#allocation5 + $0x490] sm:$0xff]
    %v268 = vld [vmem:[#allocation5 + $0x498] sm:$0xff]
    %v269 = vld [vmem:[#allocation5 + $0x4a0] sm:$0xff]
    %v270 = vld [vmem:[#allocation5 + $0x4a8] sm:$0xff]
    %v271 = vld [vmem:[#allocation5 + $0x4b0] sm:$0xff]
    %v272 = vld [vmem:[#allocation5 + $0x4b8] sm:$0xff]
    %v273 = vld [vmem:[#allocation5 + $0x4c0] sm:$0xff]
    %v274 = vld [vmem:[#allocation5 + $0x4c8] sm:$0xff]
    %v275 = vld [vmem:[#allocation5 + $0x4d0] sm:$0xff]
    %v276 = vld [vmem:[#allocation5 + $0x4d8] sm:$0xff]
    %v277 = vld [vmem:[#allocation5 + $0x4e0] sm:$0xff]
    %v278 = vld [vmem:[#allocation5 + $0x4e8] sm:$0xff]
    %v279 = vld [vmem:[#allocation5 + $0x4f0] sm:$0xff]
    %v280 = vld [vmem:[#allocation5 + $0x4f8] sm:$0xff]
    %v281 = vld [vmem:[#allocation5 + $0x500] sm:$0xff]
    %v282 = vld [vmem:[#allocation5 + $0x508] sm:$0xff]
    %v283 = vld [vmem:[#allocation5 + $0x510] sm:$0xff]
    %v284 = vld [vmem:[#allocation5 + $0x518] sm:$0xff]
    %v285 = vld [vmem:[#allocation5 + $0x520] sm:$0xff]
    %v286 = vld [vmem:[#allocation5 + $0x528] sm:$0xff]
    %v287 = vld [vmem:[#allocation5 + $0x530] sm:$0xff]
    %v288 = vld [vmem:[#allocation5 + $0x538] sm:$0xff]
    %v289 = vld [vmem:[#allocation5 + $0x540] sm:$0xff]
    %v290 = vld [vmem:[#allocation5 + $0x548] sm:$0xff]
    %v291 = vld [vmem:[#allocation5 + $0x550] sm:$0xff]
    %v292 = vld [vmem:[#allocation5 + $0x558] sm:$0xff]
    %v293 = vld [vmem:[#allocation5 + $0x560] sm:$0xff]
    %v294 = vld [vmem:[#allocation5 + $0x568] sm:$0xff]
    %v295 = vld [vmem:[#allocation5 + $0x570] sm:$0xff]
    %v296 = vld [vmem:[#allocation5 + $0x578] sm:$0xff]
    %v297 = vld [vmem:[#allocation5 + $0x580] sm:$0xff]
    %v298 = vld [vmem:[#allocation5 + $0x588] sm:$0xff]
    %v299 = vld [vmem:[#allocation5 + $0x590] sm:$0xff]
    %v300 = vld [vmem:[#allocation5 + $0x598] sm:$0xff]
    %v301 = vld [vmem:[#allocation5 + $0x5a0] sm:$0xff]
    %v302 = vld [vmem:[#allocation5 + $0x5a8] sm:$0xff]
    %v303 = vld [vmem:[#allocation5 + $0x5b0] sm:$0xff]
    %v304 = vld [vmem:[#allocation5 + $0x5b8] sm:$0xff]
    %v305 = vld [vmem:[#allocation5 + $0x5c0] sm:$0xff]
    %v306 = vld [vmem:[#allocation5 + $0x5c8] sm:$0xff]
    %v307 = vld [vmem:[#allocation5 + $0x5d0] sm:$0xff]
    %v308 = vld [vmem:[#allocation5 + $0x5d8] sm:$0xff]
    %v309 = vld [vmem:[#allocation5 + $0x5e0] sm:$0xff]
    %v310 = vld [vmem:[#allocation5 + $0x5e8] sm:$0xff]
    %v311 = vld [vmem:[#allocation5 + $0x5f0] sm:$0xff]
    %v312 = vld [vmem:[#allocation5 + $0x5f8] sm:$0xff]
    %v313 = vld [vmem:[#allocation7] sm:$0xf]
    %v315 = vperm.slane %v313, 0
    %v316 = vperm.slane %v313, 1
    %v317 = vperm.slane %v313, 2
    %v318 = vperm.slane %v313, 3
    %v515 = vunpack.c.l.b16 %v121
    %v516 = vunpack.c.h.b16 %v121
    %v517 = vunpack.c.l.b16 %v122
    %v518 = vunpack.c.h.b16 %v122
    %v519 = vunpack.c.l.b16 %v123
    %v520 = vunpack.c.h.b16 %v123
    %v521 = vunpack.c.l.b16 %v124
    %v522 = vunpack.c.h.b16 %v124
    %v523 = vunpack.c.l.b16 %v125
    %v524 = vunpack.c.h.b16 %v125
    %v525 = vunpack.c.l.b16 %v126
    %v526 = vunpack.c.h.b16 %v126
    %v527 = vunpack.c.l.b16 %v127
    %v528 = vunpack.c.h.b16 %v127
    %v529 = vunpack.c.l.b16 %v128
    %v530 = vunpack.c.h.b16 %v128
    %v531 = vunpack.c.l.b16 %v129
    %v532 = vunpack.c.h.b16 %v129
    %v533 = vunpack.c.l.b16 %v130
    %v534 = vunpack.c.h.b16 %v130
    %v535 = vunpack.c.l.b16 %v131
    %v536 = vunpack.c.h.b16 %v131
    %v537 = vunpack.c.l.b16 %v132
    %v538 = vunpack.c.h.b16 %v132
    %v539 = vunpack.c.l.b16 %v133
    %v540 = vunpack.c.h.b16 %v133
    %v541 = vunpack.c.l.b16 %v134
    %v542 = vunpack.c.h.b16 %v134
    %v543 = vunpack.c.l.b16 %v135
    %v544 = vunpack.c.h.b16 %v135
    %v545 = vunpack.c.l.b16 %v136
    %v546 = vunpack.c.h.b16 %v136
    %v547 = vunpack.c.l.b16 %v137
    %v548 = vunpack.c.h.b16 %v137
    %v549 = vunpack.c.l.b16 %v138
    %v550 = vunpack.c.h.b16 %v138
    %v551 = vunpack.c.l.b16 %v139
    %v552 = vunpack.c.h.b16 %v139
    %v553 = vunpack.c.l.b16 %v140
    %v554 = vunpack.c.h.b16 %v140
    %v555 = vunpack.c.l.b16 %v141
    %v556 = vunpack.c.h.b16 %v141
    %v557 = vunpack.c.l.b16 %v142
    %v558 = vunpack.c.h.b16 %v142
    %v559 = vunpack.c.l.b16 %v143
    %v560 = vunpack.c.h.b16 %v143
    %v561 = vunpack.c.l.b16 %v144
    %v562 = vunpack.c.h.b16 %v144
    %v563 = vunpack.c.l.b16 %v145
    %v564 = vunpack.c.h.b16 %v145
    %v565 = vunpack.c.l.b16 %v146
    %v566 = vunpack.c.h.b16 %v146
    %v567 = vunpack.c.l.b16 %v147
    %v568 = vunpack.c.h.b16 %v147
    %v569 = vunpack.c.l.b16 %v148
    %v570 = vunpack.c.h.b16 %v148
    %v571 = vunpack.c.l.b16 %v149
    %v572 = vunpack.c.h.b16 %v149
    %v573 = vunpack.c.l.b16 %v150
    %v574 = vunpack.c.h.b16 %v150
    %v575 = vunpack.c.l.b16 %v151
    %v576 = vunpack.c.h.b16 %v151
    %v577 = vunpack.c.l.b16 %v152
    %v578 = vunpack.c.h.b16 %v152
    %v579 = vunpack.c.l.b16 %v153
    %v580 = vunpack.c.h.b16 %v153
    %v581 = vunpack.c.l.b16 %v154
    %v582 = vunpack.c.h.b16 %v154
    %v583 = vunpack.c.l.b16 %v155
    %v584 = vunpack.c.h.b16 %v155
    %v585 = vunpack.c.l.b16 %v156
    %v586 = vunpack.c.h.b16 %v156
    %v587 = vunpack.c.l.b16 %v157
    %v588 = vunpack.c.h.b16 %v157
    %v589 = vunpack.c.l.b16 %v158
    %v590 = vunpack.c.h.b16 %v158
    %v591 = vunpack.c.l.b16 %v159
    %v592 = vunpack.c.h.b16 %v159
    %v593 = vunpack.c.l.b16 %v160
    %v594 = vunpack.c.h.b16 %v160
    %v595 = vunpack.c.l.b16 %v161
    %v596 = vunpack.c.h.b16 %v161
    %v597 = vunpack.c.l.b16 %v162
    %v598 = vunpack.c.h.b16 %v162
    %v599 = vunpack.c.l.b16 %v163
    %v600 = vunpack.c.h.b16 %v163
    %v601 = vunpack.c.l.b16 %v164
    %v602 = vunpack.c.h.b16 %v164
    %v603 = vunpack.c.l.b16 %v165
    %v604 = vunpack.c.h.b16 %v165
    %v605 = vunpack.c.l.b16 %v166
    %v606 = vunpack.c.h.b16 %v166
    %v607 = vunpack.c.l.b16 %v167
    %v608 = vunpack.c.h.b16 %v167
    %v609 = vunpack.c.l.b16 %v168
    %v610 = vunpack.c.h.b16 %v168
    %v611 = vunpack.c.l.b16 %v169
    %v612 = vunpack.c.h.b16 %v169
    %v613 = vunpack.c.l.b16 %v170
    %v614 = vunpack.c.h.b16 %v170
    %v615 = vunpack.c.l.b16 %v171
    %v616 = vunpack.c.h.b16 %v171
    %v617 = vunpack.c.l.b16 %v172
    %v618 = vunpack.c.h.b16 %v172
    %v619 = vunpack.c.l.b16 %v173
    %v620 = vunpack.c.h.b16 %v173
    %v621 = vunpack.c.l.b16 %v174
    %v622 = vunpack.c.h.b16 %v174
    %v623 = vunpack.c.l.b16 %v175
    %v624 = vunpack.c.h.b16 %v175
    %v625 = vunpack.c.l.b16 %v176
    %v626 = vunpack.c.h.b16 %v176
    %v627 = vunpack.c.l.b16 %v177
    %v628 = vunpack.c.h.b16 %v177
    %v629 = vunpack.c.l.b16 %v178
    %v630 = vunpack.c.h.b16 %v178
    %v631 = vunpack.c.l.b16 %v179
    %v632 = vunpack.c.h.b16 %v179
    %v633 = vunpack.c.l.b16 %v180
    %v634 = vunpack.c.h.b16 %v180
    %v635 = vunpack.c.l.b16 %v181
    %v636 = vunpack.c.h.b16 %v181
    %v637 = vunpack.c.l.b16 %v182
    %v638 = vunpack.c.h.b16 %v182
    %v639 = vunpack.c.l.b16 %v183
    %v640 = vunpack.c.h.b16 %v183
    %v641 = vunpack.c.l.b16 %v184
    %v642 = vunpack.c.h.b16 %v184
    %v643 = vunpack.c.l.b16 %v185
    %v644 = vunpack.c.h.b16 %v185
    %v645 = vunpack.c.l.b16 %v186
    %v646 = vunpack.c.h.b16 %v186
    %v647 = vunpack.c.l.b16 %v187
    %v648 = vunpack.c.h.b16 %v187
    %v649 = vunpack.c.l.b16 %v188
    %v650 = vunpack.c.h.b16 %v188
    %v651 = vunpack.c.l.b16 %v189
    %v652 = vunpack.c.h.b16 %v189
    %v653 = vunpack.c.l.b16 %v190
    %v654 = vunpack.c.h.b16 %v190
    %v655 = vunpack.c.l.b16 %v191
    %v656 = vunpack.c.h.b16 %v191
    %v657 = vunpack.c.l.b16 %v192
    %v658 = vunpack.c.h.b16 %v192
    %v659 = vunpack.c.l.b16 %v193
    %v660 = vunpack.c.h.b16 %v193
    %v661 = vunpack.c.l.b16 %v194
    %v662 = vunpack.c.h.b16 %v194
    %v663 = vunpack.c.l.b16 %v195
    %v664 = vunpack.c.h.b16 %v195
    %v665 = vunpack.c.l.b16 %v196
    %v666 = vunpack.c.h.b16 %v196
    %v667 = vunpack.c.l.b16 %v197
    %v668 = vunpack.c.h.b16 %v197
    %v669 = vunpack.c.l.b16 %v198
    %v670 = vunpack.c.h.b16 %v198
    %v671 = vunpack.c.l.b16 %v199
    %v672 = vunpack.c.h.b16 %v199
    %v673 = vunpack.c.l.b16 %v200
    %v674 = vunpack.c.h.b16 %v200
    %v675 = vunpack.c.l.b16 %v201
    %v676 = vunpack.c.h.b16 %v201
    %v677 = vunpack.c.l.b16 %v202
    %v678 = vunpack.c.h.b16 %v202
    %v679 = vunpack.c.l.b16 %v203
    %v680 = vunpack.c.h.b16 %v203
    %v681 = vunpack.c.l.b16 %v204
    %v682 = vunpack.c.h.b16 %v204
    %v683 = vunpack.c.l.b16 %v205
    %v684 = vunpack.c.h.b16 %v205
    %v685 = vunpack.c.l.b16 %v206
    %v686 = vunpack.c.h.b16 %v206
    %v687 = vunpack.c.l.b16 %v207
    %v688 = vunpack.c.h.b16 %v207
    %v689 = vunpack.c.l.b16 %v208
    %v690 = vunpack.c.h.b16 %v208
    %v691 = vunpack.c.l.b16 %v209
    %v692 = vunpack.c.h.b16 %v209
    %v693 = vunpack.c.l.b16 %v210
    %v694 = vunpack.c.h.b16 %v210
    %v695 = vunpack.c.l.b16 %v211
    %v696 = vunpack.c.h.b16 %v211
    %v697 = vunpack.c.l.b16 %v212
    %v698 = vunpack.c.h.b16 %v212
    %v699 = vunpack.c.l.b16 %v213
    %v700 = vunpack.c.h.b16 %v213
    %v701 = vunpack.c.l.b16 %v214
    %v702 = vunpack.c.h.b16 %v214
    %v703 = vunpack.c.l.b16 %v215
    %v704 = vunpack.c.h.b16 %v215
    %v705 = vunpack.c.l.b16 %v216
    %v706 = vunpack.c.h.b16 %v216
    %v707 = vunpack.c.l.b16 %v217
    %v708 = vunpack.c.h.b16 %v217
    %v709 = vunpack.c.l.b16 %v218
    %v710 = vunpack.c.h.b16 %v218
    %v711 = vunpack.c.l.b16 %v219
    %v712 = vunpack.c.h.b16 %v219
    %v713 = vunpack.c.l.b16 %v220
    %v714 = vunpack.c.h.b16 %v220
    %v715 = vunpack.c.l.b16 %v221
    %v716 = vunpack.c.h.b16 %v221
    %v717 = vunpack.c.l.b16 %v222
    %v718 = vunpack.c.h.b16 %v222
    %v719 = vunpack.c.l.b16 %v223
    %v720 = vunpack.c.h.b16 %v223
    %v721 = vunpack.c.l.b16 %v224
    %v722 = vunpack.c.h.b16 %v224
    %v723 = vunpack.c.l.b16 %v225
    %v724 = vunpack.c.h.b16 %v225
    %v725 = vunpack.c.l.b16 %v226
    %v726 = vunpack.c.h.b16 %v226
    %v727 = vunpack.c.l.b16 %v227
    %v728 = vunpack.c.h.b16 %v227
    %v729 = vunpack.c.l.b16 %v228
    %v730 = vunpack.c.h.b16 %v228
    %v731 = vunpack.c.l.b16 %v229
    %v732 = vunpack.c.h.b16 %v229
    %v733 = vunpack.c.l.b16 %v230
    %v734 = vunpack.c.h.b16 %v230
    %v735 = vunpack.c.l.b16 %v231
    %v736 = vunpack.c.h.b16 %v231
    %v737 = vunpack.c.l.b16 %v232
    %v738 = vunpack.c.h.b16 %v232
    %v739 = vunpack.c.l.b16 %v233
    %v740 = vunpack.c.h.b16 %v233
    %v741 = vunpack.c.l.b16 %v234
    %v742 = vunpack.c.h.b16 %v234
    %v743 = vunpack.c.l.b16 %v235
    %v744 = vunpack.c.h.b16 %v235
    %v745 = vunpack.c.l.b16 %v236
    %v746 = vunpack.c.h.b16 %v236
    %v747 = vunpack.c.l.b16 %v237
    %v748 = vunpack.c.h.b16 %v237
    %v749 = vunpack.c.l.b16 %v238
    %v750 = vunpack.c.h.b16 %v238
    %v751 = vunpack.c.l.b16 %v239
    %v752 = vunpack.c.h.b16 %v239
    %v753 = vunpack.c.l.b16 %v240
    %v754 = vunpack.c.h.b16 %v240
    %v755 = vunpack.c.l.b16 %v241
    %v756 = vunpack.c.h.b16 %v241
    %v757 = vunpack.c.l.b16 %v242
    %v758 = vunpack.c.h.b16 %v242
    %v759 = vunpack.c.l.b16 %v243
    %v760 = vunpack.c.h.b16 %v243
    %v761 = vunpack.c.l.b16 %v244
    %v762 = vunpack.c.h.b16 %v244
    %v763 = vunpack.c.l.b16 %v245
    %v764 = vunpack.c.h.b16 %v245
    %v765 = vunpack.c.l.b16 %v246
    %v766 = vunpack.c.h.b16 %v246
    %v767 = vunpack.c.l.b16 %v247
    %v768 = vunpack.c.h.b16 %v247
    %v769 = vunpack.c.l.b16 %v248
    %v770 = vunpack.c.h.b16 %v248
    %v771 = vunpack.c.l.b16 %v249
    %v772 = vunpack.c.h.b16 %v249
    %v773 = vunpack.c.l.b16 %v250
    %v774 = vunpack.c.h.b16 %v250
    %v775 = vunpack.c.l.b16 %v251
    %v776 = vunpack.c.h.b16 %v251
    %v777 = vunpack.c.l.b16 %v252
    %v778 = vunpack.c.h.b16 %v252
    %v779 = vunpack.c.l.b16 %v253
    %v780 = vunpack.c.h.b16 %v253
    %v781 = vunpack.c.l.b16 %v254
    %v782 = vunpack.c.h.b16 %v254
    %v783 = vunpack.c.l.b16 %v255
    %v784 = vunpack.c.h.b16 %v255
    %v785 = vunpack.c.l.b16 %v256
    %v786 = vunpack.c.h.b16 %v256
    %v787 = vunpack.c.l.b16 %v257
    %v788 = vunpack.c.h.b16 %v257
    %v789 = vunpack.c.l.b16 %v258
    %v790 = vunpack.c.h.b16 %v258
    %v791 = vunpack.c.l.b16 %v259
    %v792 = vunpack.c.h.b16 %v259
    %v793 = vunpack.c.l.b16 %v260
    %v794 = vunpack.c.h.b16 %v260
    %v795 = vunpack.c.l.b16 %v261
    %v796 = vunpack.c.h.b16 %v261
    %v797 = vunpack.c.l.b16 %v262
    %v798 = vunpack.c.h.b16 %v262
    %v799 = vunpack.c.l.b16 %v263
    %v800 = vunpack.c.h.b16 %v263
    %v801 = vunpack.c.l.b16 %v264
    %v802 = vunpack.c.h.b16 %v264
    %v803 = vunpack.c.l.b16 %v265
    %v804 = vunpack.c.h.b16 %v265
    %v805 = vunpack.c.l.b16 %v266
    %v806 = vunpack.c.h.b16 %v266
    %v807 = vunpack.c.l.b16 %v267
    %v808 = vunpack.c.h.b16 %v267
    %v809 = vunpack.c.l.b16 %v268
    %v810 = vunpack.c.h.b16 %v268
    %v811 = vunpack.c.l.b16 %v269
    %v812 = vunpack.c.h.b16 %v269
    %v813 = vunpack.c.l.b16 %v270
    %v814 = vunpack.c.h.b16 %v270
    %v815 = vunpack.c.l.b16 %v271
    %v816 = vunpack.c.h.b16 %v271
    %v817 = vunpack.c.l.b16 %v272
    %v818 = vunpack.c.h.b16 %v272
    %v819 = vunpack.c.l.b16 %v273
    %v820 = vunpack.c.h.b16 %v273
    %v821 = vunpack.c.l.b16 %v274
    %v822 = vunpack.c.h.b16 %v274
    %v823 = vunpack.c.l.b16 %v275
    %v824 = vunpack.c.h.b16 %v275
    %v825 = vunpack.c.l.b16 %v276
    %v826 = vunpack.c.h.b16 %v276
    %v827 = vunpack.c.l.b16 %v277
    %v828 = vunpack.c.h.b16 %v277
    %v829 = vunpack.c.l.b16 %v278
    %v830 = vunpack.c.h.b16 %v278
    %v831 = vunpack.c.l.b16 %v279
    %v832 = vunpack.c.h.b16 %v279
    %v833 = vunpack.c.l.b16 %v280
    %v834 = vunpack.c.h.b16 %v280
    %v835 = vunpack.c.l.b16 %v281
    %v836 = vunpack.c.h.b16 %v281
    %v837 = vunpack.c.l.b16 %v282
    %v838 = vunpack.c.h.b16 %v282
    %v839 = vunpack.c.l.b16 %v283
    %v840 = vunpack.c.h.b16 %v283
    %v841 = vunpack.c.l.b16 %v284
    %v842 = vunpack.c.h.b16 %v284
    %v843 = vunpack.c.l.b16 %v285
    %v844 = vunpack.c.h.b16 %v285
    %v845 = vunpack.c.l.b16 %v286
    %v846 = vunpack.c.h.b16 %v286
    %v847 = vunpack.c.l.b16 %v287
    %v848 = vunpack.c.h.b16 %v287
    %v849 = vunpack.c.l.b16 %v288
    %v850 = vunpack.c.h.b16 %v288
    %v851 = vunpack.c.l.b16 %v289
    %v852 = vunpack.c.h.b16 %v289
    %v853 = vunpack.c.l.b16 %v290
    %v854 = vunpack.c.h.b16 %v290
    %v855 = vunpack.c.l.b16 %v291
    %v856 = vunpack.c.h.b16 %v291
    %v857 = vunpack.c.l.b16 %v292
    %v858 = vunpack.c.h.b16 %v292
    %v859 = vunpack.c.l.b16 %v293
    %v860 = vunpack.c.h.b16 %v293
    %v861 = vunpack.c.l.b16 %v294
    %v862 = vunpack.c.h.b16 %v294
    %v863 = vunpack.c.l.b16 %v295
    %v864 = vunpack.c.h.b16 %v295
    %v865 = vunpack.c.l.b16 %v296
    %v866 = vunpack.c.h.b16 %v296
    %v867 = vunpack.c.l.b16 %v297
    %v868 = vunpack.c.h.b16 %v297
    %v869 = vunpack.c.l.b16 %v298
    %v870 = vunpack.c.h.b16 %v298
    %v871 = vunpack.c.l.b16 %v299
    %v872 = vunpack.c.h.b16 %v299
    %v873 = vunpack.c.l.b16 %v300
    %v874 = vunpack.c.h.b16 %v300
    %v875 = vunpack.c.l.b16 %v301
    %v876 = vunpack.c.h.b16 %v301
    %v877 = vunpack.c.l.b16 %v302
    %v878 = vunpack.c.h.b16 %v302
    %v879 = vunpack.c.l.b16 %v303
    %v880 = vunpack.c.h.b16 %v303
    %v881 = vunpack.c.l.b16 %v304
    %v882 = vunpack.c.h.b16 %v304
    %v883 = vunpack.c.l.b16 %v305
    %v884 = vunpack.c.h.b16 %v305
    %v885 = vunpack.c.l.b16 %v306
    %v886 = vunpack.c.h.b16 %v306
    %v887 = vunpack.c.l.b16 %v307
    %v888 = vunpack.c.h.b16 %v307
    %v889 = vunpack.c.l.b16 %v308
    %v890 = vunpack.c.h.b16 %v308
    %v891 = vunpack.c.l.b16 %v309
    %v892 = vunpack.c.h.b16 %v309
    %v893 = vunpack.c.l.b16 %v310
    %v894 = vunpack.c.h.b16 %v310
    %v895 = vunpack.c.l.b16 %v311
    %v896 = vunpack.c.h.b16 %v311
    %v897 = vunpack.c.l.b16 %v312
    %v898 = vunpack.c.h.b16 %v312
    %v899 = vpack.c.b16 %v519, %v515
    %v900 = vpack.c.b16 %v520, %v516
    %v901 = vpack.c.b16 %v521, %v517
    %v902 = vpack.c.b16 %v522, %v518
    %v903 = vpack.c.b16 %v527, %v523
    %v904 = vpack.c.b16 %v528, %v524
    %v905 = vpack.c.b16 %v529, %v525
    %v906 = vpack.c.b16 %v530, %v526
    %v907 = vpack.c.b16 %v535, %v531
    %v908 = vpack.c.b16 %v536, %v532
    %v909 = vpack.c.b16 %v537, %v533
    %v910 = vpack.c.b16 %v538, %v534
    %v911 = vpack.c.b16 %v543, %v539
    %v912 = vpack.c.b16 %v544, %v540
    %v913 = vpack.c.b16 %v545, %v541
    %v914 = vpack.c.b16 %v546, %v542
    %v915 = vpack.c.b16 %v551, %v547
    %v916 = vpack.c.b16 %v552, %v548
    %v917 = vpack.c.b16 %v553, %v549
    %v918 = vpack.c.b16 %v554, %v550
    %v919 = vpack.c.b16 %v559, %v555
    %v920 = vpack.c.b16 %v560, %v556
    %v921 = vpack.c.b16 %v561, %v557
    %v922 = vpack.c.b16 %v562, %v558
    %v923 = vpack.c.b16 %v567, %v563
    %v924 = vpack.c.b16 %v568, %v564
    %v925 = vpack.c.b16 %v569, %v565
    %v926 = vpack.c.b16 %v570, %v566
    %v927 = vpack.c.b16 %v575, %v571
    %v928 = vpack.c.b16 %v576, %v572
    %v929 = vpack.c.b16 %v577, %v573
    %v930 = vpack.c.b16 %v578, %v574
    %v931 = vpack.c.b16 %v583, %v579
    %v932 = vpack.c.b16 %v584, %v580
    %v933 = vpack.c.b16 %v585, %v581
    %v934 = vpack.c.b16 %v586, %v582
    %v935 = vpack.c.b16 %v591, %v587
    %v936 = vpack.c.b16 %v592, %v588
    %v937 = vpack.c.b16 %v593, %v589
    %v938 = vpack.c.b16 %v594, %v590
    %v939 = vpack.c.b16 %v599, %v595
    %v940 = vpack.c.b16 %v600, %v596
    %v941 = vpack.c.b16 %v601, %v597
    %v942 = vpack.c.b16 %v602, %v598
    %v943 = vpack.c.b16 %v607, %v603
    %v944 = vpack.c.b16 %v608, %v604
    %v945 = vpack.c.b16 %v609, %v605
    %v946 = vpack.c.b16 %v610, %v606
    %v947 = vpack.c.b16 %v615, %v611
    %v948 = vpack.c.b16 %v616, %v612
    %v949 = vpack.c.b16 %v617, %v613
    %v950 = vpack.c.b16 %v618, %v614
    %v951 = vpack.c.b16 %v623, %v619
    %v952 = vpack.c.b16 %v624, %v620
    %v953 = vpack.c.b16 %v625, %v621
    %v954 = vpack.c.b16 %v626, %v622
    %v955 = vpack.c.b16 %v631, %v627
    %v956 = vpack.c.b16 %v632, %v628
    %v957 = vpack.c.b16 %v633, %v629
    %v958 = vpack.c.b16 %v634, %v630
    %v959 = vpack.c.b16 %v639, %v635
    %v960 = vpack.c.b16 %v640, %v636
    %v961 = vpack.c.b16 %v641, %v637
    %v962 = vpack.c.b16 %v642, %v638
    %v963 = vpack.c.b16 %v647, %v643
    %v964 = vpack.c.b16 %v648, %v644
    %v965 = vpack.c.b16 %v649, %v645
    %v966 = vpack.c.b16 %v650, %v646
    %v967 = vpack.c.b16 %v655, %v651
    %v968 = vpack.c.b16 %v656, %v652
    %v969 = vpack.c.b16 %v657, %v653
    %v970 = vpack.c.b16 %v658, %v654
    %v971 = vpack.c.b16 %v663, %v659
    %v972 = vpack.c.b16 %v664, %v660
    %v973 = vpack.c.b16 %v665, %v661
    %v974 = vpack.c.b16 %v666, %v662
    %v975 = vpack.c.b16 %v671, %v667
    %v976 = vpack.c.b16 %v672, %v668
    %v977 = vpack.c.b16 %v673, %v669
    %v978 = vpack.c.b16 %v674, %v670
    %v979 = vpack.c.b16 %v679, %v675
    %v980 = vpack.c.b16 %v680, %v676
    %v981 = vpack.c.b16 %v681, %v677
    %v982 = vpack.c.b16 %v682, %v678
    %v983 = vpack.c.b16 %v687, %v683
    %v984 = vpack.c.b16 %v688, %v684
    %v985 = vpack.c.b16 %v689, %v685
    %v986 = vpack.c.b16 %v690, %v686
    %v987 = vpack.c.b16 %v695, %v691
    %v988 = vpack.c.b16 %v696, %v692
    %v989 = vpack.c.b16 %v697, %v693
    %v990 = vpack.c.b16 %v698, %v694
    %v991 = vpack.c.b16 %v703, %v699
    %v992 = vpack.c.b16 %v704, %v700
    %v993 = vpack.c.b16 %v705, %v701
    %v994 = vpack.c.b16 %v706, %v702
    %v995 = vpack.c.b16 %v711, %v707
    %v996 = vpack.c.b16 %v712, %v708
    %v997 = vpack.c.b16 %v713, %v709
    %v998 = vpack.c.b16 %v714, %v710
    %v999 = vpack.c.b16 %v719, %v715
    %v1000 = vpack.c.b16 %v720, %v716
    %v1001 = vpack.c.b16 %v721, %v717
    %v1002 = vpack.c.b16 %v722, %v718
    %v1003 = vpack.c.b16 %v727, %v723
    %v1004 = vpack.c.b16 %v728, %v724
    %v1005 = vpack.c.b16 %v729, %v725
    %v1006 = vpack.c.b16 %v730, %v726
    %v1007 = vpack.c.b16 %v735, %v731
    %v1008 = vpack.c.b16 %v736, %v732
    %v1009 = vpack.c.b16 %v737, %v733
    %v1010 = vpack.c.b16 %v738, %v734
    %v1011 = vpack.c.b16 %v743, %v739
    %v1012 = vpack.c.b16 %v744, %v740
    %v1013 = vpack.c.b16 %v745, %v741
    %v1014 = vpack.c.b16 %v746, %v742
    %v1015 = vpack.c.b16 %v751, %v747
    %v1016 = vpack.c.b16 %v752, %v748
    %v1017 = vpack.c.b16 %v753, %v749
    %v1018 = vpack.c.b16 %v754, %v750
    %v1019 = vpack.c.b16 %v759, %v755
    %v1020 = vpack.c.b16 %v760, %v756
    %v1021 = vpack.c.b16 %v761, %v757
    %v1022 = vpack.c.b16 %v762, %v758
    %v1023 = vpack.c.b16 %v767, %v763
    %v1024 = vpack.c.b16 %v768, %v764
    %v1025 = vpack.c.b16 %v769, %v765
    %v1026 = vpack.c.b16 %v770, %v766
    %v1027 = vpack.c.b16 %v775, %v771
    %v1028 = vpack.c.b16 %v776, %v772
    %v1029 = vpack.c.b16 %v777, %v773
    %v1030 = vpack.c.b16 %v778, %v774
    %v1031 = vpack.c.b16 %v783, %v779
    %v1032 = vpack.c.b16 %v784, %v780
    %v1033 = vpack.c.b16 %v785, %v781
    %v1034 = vpack.c.b16 %v786, %v782
    %v1035 = vpack.c.b16 %v791, %v787
    %v1036 = vpack.c.b16 %v792, %v788
    %v1037 = vpack.c.b16 %v793, %v789
    %v1038 = vpack.c.b16 %v794, %v790
    %v1039 = vpack.c.b16 %v799, %v795
    %v1040 = vpack.c.b16 %v800, %v796
    %v1041 = vpack.c.b16 %v801, %v797
    %v1042 = vpack.c.b16 %v802, %v798
    %v1043 = vpack.c.b16 %v807, %v803
    %v1044 = vpack.c.b16 %v808, %v804
    %v1045 = vpack.c.b16 %v809, %v805
    %v1046 = vpack.c.b16 %v810, %v806
    %v1047 = vpack.c.b16 %v815, %v811
    %v1048 = vpack.c.b16 %v816, %v812
    %v1049 = vpack.c.b16 %v817, %v813
    %v1050 = vpack.c.b16 %v818, %v814
    %v1051 = vpack.c.b16 %v823, %v819
    %v1052 = vpack.c.b16 %v824, %v820
    %v1053 = vpack.c.b16 %v825, %v821
    %v1054 = vpack.c.b16 %v826, %v822
    %v1055 = vpack.c.b16 %v831, %v827
    %v1056 = vpack.c.b16 %v832, %v828
    %v1057 = vpack.c.b16 %v833, %v829
    %v1058 = vpack.c.b16 %v834, %v830
    %v1059 = vpack.c.b16 %v839, %v835
    %v1060 = vpack.c.b16 %v840, %v836
    %v1061 = vpack.c.b16 %v841, %v837
    %v1062 = vpack.c.b16 %v842, %v838
    %v1063 = vpack.c.b16 %v847, %v843
    %v1064 = vpack.c.b16 %v848, %v844
    %v1065 = vpack.c.b16 %v849, %v845
    %v1066 = vpack.c.b16 %v850, %v846
    %v1067 = vpack.c.b16 %v855, %v851
    %v1068 = vpack.c.b16 %v856, %v852
    %v1069 = vpack.c.b16 %v857, %v853
    %v1070 = vpack.c.b16 %v858, %v854
    %v1071 = vpack.c.b16 %v863, %v859
    %v1072 = vpack.c.b16 %v864, %v860
    %v1073 = vpack.c.b16 %v865, %v861
    %v1074 = vpack.c.b16 %v866, %v862
    %v1075 = vpack.c.b16 %v871, %v867
    %v1076 = vpack.c.b16 %v872, %v868
    %v1077 = vpack.c.b16 %v873, %v869
    %v1078 = vpack.c.b16 %v874, %v870
    %v1079 = vpack.c.b16 %v879, %v875
    %v1080 = vpack.c.b16 %v880, %v876
    %v1081 = vpack.c.b16 %v881, %v877
    %v1082 = vpack.c.b16 %v882, %v878
    %v1083 = vpack.c.b16 %v887, %v883
    %v1084 = vpack.c.b16 %v888, %v884
    %v1085 = vpack.c.b16 %v889, %v885
    %v1086 = vpack.c.b16 %v890, %v886
    %v1087 = vpack.c.b16 %v895, %v891
    %v1088 = vpack.c.b16 %v896, %v892
    %v1089 = vpack.c.b16 %v897, %v893
    %v1090 = vpack.c.b16 %v898, %v894
    %1283 = vmatpush.bf16.msra.mxu0 %v927
    %1284 = vmatpush.bf16.msra.mxu0 %v923
    %1285 = vmatpush.bf16.msra.mxu0 %v919
    %1286 = vmatpush.bf16.msra.mxu0 %v915
    %1287 = vmatpush.bf16.msra.mxu0 %v911
    %1288 = vmatpush.bf16.msra.mxu0 %v907
    %1289 = vmatpush.bf16.msra.mxu0 %v903
    %1290 = vmatpush.bf16.msra.mxu0 %v899
    %1291 = vmatmul.bf16.gmra.mxu0 %v115
    %v1292 = vpop.f32.mrf.mxu0
    %v1293 = vadd.f32 %v315, %v1292
    %v1294 = vpop.f32.mrf.mxu0
    %v1295 = vadd.f32 %v315, %v1294
    %1296 = vdwg.mxu0
    %1297 = vmatpush.bf16.msra.mxu0 %v959
    %1298 = vmatpush.bf16.msra.mxu0 %v955
    %1299 = vmatpush.bf16.msra.mxu0 %v951
    %1300 = vmatpush.bf16.msra.mxu0 %v947
    %1301 = vmatpush.bf16.msra.mxu0 %v943
    %1302 = vmatpush.bf16.msra.mxu0 %v939
    %1303 = vmatpush.bf16.msra.mxu0 %v935
    %1304 = vmatpush.bf16.msra.mxu0 %v931
    %1305 = vmatmul.bf16.gmra.mxu0 %v116
    %v1306 = vpop.f32.mrf.mxu0
    %v1307 = vadd.f32 %v1293, %v1306
    %v1308 = vpop.f32.mrf.mxu0
    %v1309 = vadd.f32 %v1295, %v1308
    %1310 = vdwg.mxu0
    %1311 = vmatpush.bf16.msra.mxu0 %v991
    %1312 = vmatpush.bf16.msra.mxu0 %v987
    %1313 = vmatpush.bf16.msra.mxu0 %v983
    %1314 = vmatpush.bf16.msra.mxu0 %v979
    %1315 = vmatpush.bf16.msra.mxu0 %v975
    %1316 = vmatpush.bf16.msra.mxu0 %v971
    %1317 = vmatpush.bf16.msra.mxu0 %v967
    %1318 = vmatpush.bf16.msra.mxu0 %v963
    %1319 = vmatmul.bf16.gmra.mxu0 %v117
    %v1320 = vpop.f32.mrf.mxu0
    %v1321 = vadd.f32 %v1307, %v1320
    %v1322 = vpop.f32.mrf.mxu0
    %v1323 = vadd.f32 %v1309, %v1322
    %1324 = vdwg.mxu0
    %1325 = vmatpush.bf16.msra.mxu0 %v1023
    %1326 = vmatpush.bf16.msra.mxu0 %v1019
    %1327 = vmatpush.bf16.msra.mxu0 %v1015
    %1328 = vmatpush.bf16.msra.mxu0 %v1011
    %1329 = vmatpush.bf16.msra.mxu0 %v1007
    %1330 = vmatpush.bf16.msra.mxu0 %v1003
    %1331 = vmatpush.bf16.msra.mxu0 %v999
    %1332 = vmatpush.bf16.msra.mxu0 %v995
    %1333 = vmatmul.bf16.gmra.mxu0 %v118
    %v1334 = vpop.f32.mrf.mxu0
    %v1335 = vadd.f32 %v1321, %v1334
    %v1336 = vpop.f32.mrf.mxu0
    %v1337 = vadd.f32 %v1323, %v1336
    %1338 = vdwg.mxu0
    %1339 = vmatpush.bf16.msra.mxu0 %v1055
    %1340 = vmatpush.bf16.msra.mxu0 %v1051
    %1341 = vmatpush.bf16.msra.mxu0 %v1047
    %1342 = vmatpush.bf16.msra.mxu0 %v1043
    %1343 = vmatpush.bf16.msra.mxu0 %v1039
    %1344 = vmatpush.bf16.msra.mxu0 %v1035
    %1345 = vmatpush.bf16.msra.mxu0 %v1031
    %1346 = vmatpush.bf16.msra.mxu0 %v1027
    %1347 = vmatmul.bf16.gmra.mxu0 %v119
    %v1348 = vpop.f32.mrf.mxu0
    %v1349 = vadd.f32 %v1335, %v1348
    %v1350 = vpop.f32.mrf.mxu0
    %v1351 = vadd.f32 %v1337, %v1350
    %1352 = vdwg.mxu0
    %1353 = vmatpush.bf16.msra.mxu0 %v1087
    %1354 = vmatpush.bf16.msra.mxu0 %v1083
    %1355 = vmatpush.bf16.msra.mxu0 %v1079
    %1356 = vmatpush.bf16.msra.mxu0 %v1075
    %1357 = vmatpush.bf16.msra.mxu0 %v1071
    %1358 = vmatpush.bf16.msra.mxu0 %v1067
    %1359 = vmatpush.bf16.msra.mxu0 %v1063
    %1360 = vmatpush.bf16.msra.mxu0 %v1059
    %1361 = vmatmul.bf16.gmra.mxu0 %v120
    %v1362 = vpop.f32.mrf.mxu0
    %v1363 = vadd.f32 %v1349, %v1362
    %v1364 = vpop.f32.mrf.mxu0
    %v1365 = vadd.f32 %v1351, %v1364
    %1366 = vdwg.mxu0
    %1367 = vmatpush.bf16.msra.mxu0 %v928
    %1368 = vmatpush.bf16.msra.mxu0 %v924
    %1369 = vmatpush.bf16.msra.mxu0 %v920
    %1370 = vmatpush.bf16.msra.mxu0 %v916
    %1371 = vmatpush.bf16.msra.mxu0 %v912
    %1372 = vmatpush.bf16.msra.mxu0 %v908
    %1373 = vmatpush.bf16.msra.mxu0 %v904
    %1374 = vmatpush.bf16.msra.mxu0 %v900
    %1375 = vmatmul.bf16.gmra.mxu0 %v115
    %v1376 = vpop.f32.mrf.mxu0
    %v1377 = vadd.f32 %v316, %v1376
    %v1378 = vpop.f32.mrf.mxu0
    %v1379 = vadd.f32 %v316, %v1378
    %1380 = vdwg.mxu0
    %1381 = vmatpush.bf16.msra.mxu0 %v960
    %1382 = vmatpush.bf16.msra.mxu0 %v956
    %1383 = vmatpush.bf16.msra.mxu0 %v952
    %1384 = vmatpush.bf16.msra.mxu0 %v948
    %1385 = vmatpush.bf16.msra.mxu0 %v944
    %1386 = vmatpush.bf16.msra.mxu0 %v940
    %1387 = vmatpush.bf16.msra.mxu0 %v936
    %1388 = vmatpush.bf16.msra.mxu0 %v932
    %1389 = vmatmul.bf16.gmra.mxu0 %v116
    %v1390 = vpop.f32.mrf.mxu0
    %v1391 = vadd.f32 %v1377, %v1390
    %v1392 = vpop.f32.mrf.mxu0
    %v1393 = vadd.f32 %v1379, %v1392
    %1394 = vdwg.mxu0
    %1395 = vmatpush.bf16.msra.mxu0 %v992
    %1396 = vmatpush.bf16.msra.mxu0 %v988
    %1397 = vmatpush.bf16.msra.mxu0 %v984
    %1398 = vmatpush.bf16.msra.mxu0 %v980
    %1399 = vmatpush.bf16.msra.mxu0 %v976
    %1400 = vmatpush.bf16.msra.mxu0 %v972
    %1401 = vmatpush.bf16.msra.mxu0 %v968
    %1402 = vmatpush.bf16.msra.mxu0 %v964
    %1403 = vmatmul.bf16.gmra.mxu0 %v117
    %v1404 = vpop.f32.mrf.mxu0
    %v1405 = vadd.f32 %v1391, %v1404
    %v1406 = vpop.f32.mrf.mxu0
    %v1407 = vadd.f32 %v1393, %v1406
    %1408 = vdwg.mxu0
    %1409 = vmatpush.bf16.msra.mxu0 %v1024
    %1410 = vmatpush.bf16.msra.mxu0 %v1020
    %1411 = vmatpush.bf16.msra.mxu0 %v1016
    %1412 = vmatpush.bf16.msra.mxu0 %v1012
    %1413 = vmatpush.bf16.msra.mxu0 %v1008
    %1414 = vmatpush.bf16.msra.mxu0 %v1004
    %1415 = vmatpush.bf16.msra.mxu0 %v1000
    %1416 = vmatpush.bf16.msra.mxu0 %v996
    %1417 = vmatmul.bf16.gmra.mxu0 %v118
    %v1418 = vpop.f32.mrf.mxu0
    %v1419 = vadd.f32 %v1405, %v1418
    %v1420 = vpop.f32.mrf.mxu0
    %v1421 = vadd.f32 %v1407, %v1420
    %1422 = vdwg.mxu0
    %1423 = vmatpush.bf16.msra.mxu0 %v1056
    %1424 = vmatpush.bf16.msra.mxu0 %v1052
    %1425 = vmatpush.bf16.msra.mxu0 %v1048
    %1426 = vmatpush.bf16.msra.mxu0 %v1044
    %1427 = vmatpush.bf16.msra.mxu0 %v1040
    %1428 = vmatpush.bf16.msra.mxu0 %v1036
    %1429 = vmatpush.bf16.msra.mxu0 %v1032
    %1430 = vmatpush.bf16.msra.mxu0 %v1028
    %1431 = vmatmul.bf16.gmra.mxu0 %v119
    %v1432 = vpop.f32.mrf.mxu0
    %v1433 = vadd.f32 %v1419, %v1432
    %v1434 = vpop.f32.mrf.mxu0
    %v1435 = vadd.f32 %v1421, %v1434
    %1436 = vdwg.mxu0
    %1437 = vmatpush.bf16.msra.mxu0 %v1088
    %1438 = vmatpush.bf16.msra.mxu0 %v1084
    %1439 = vmatpush.bf16.msra.mxu0 %v1080
    %1440 = vmatpush.bf16.msra.mxu0 %v1076
    %1441 = vmatpush.bf16.msra.mxu0 %v1072
    %1442 = vmatpush.bf16.msra.mxu0 %v1068
    %1443 = vmatpush.bf16.msra.mxu0 %v1064
    %1444 = vmatpush.bf16.msra.mxu0 %v1060
    %1445 = vmatmul.bf16.gmra.mxu0 %v120
    %v1446 = vpop.f32.mrf.mxu0
    %v1447 = vadd.f32 %v1433, %v1446
    %v1448 = vpop.f32.mrf.mxu0
    %v1449 = vadd.f32 %v1435, %v1448
    %1450 = vdwg.mxu0
    %1451 = vmatpush.bf16.msra.mxu0 %v929
    %1452 = vmatpush.bf16.msra.mxu0 %v925
    %1453 = vmatpush.bf16.msra.mxu0 %v921
    %1454 = vmatpush.bf16.msra.mxu0 %v917
    %1455 = vmatpush.bf16.msra.mxu0 %v913
    %1456 = vmatpush.bf16.msra.mxu0 %v909
    %1457 = vmatpush.bf16.msra.mxu0 %v905
    %1458 = vmatpush.bf16.msra.mxu0 %v901
    %1459 = vmatmul.bf16.gmra.mxu0 %v115
    %v1460 = vpop.f32.mrf.mxu0
    %v1461 = vadd.f32 %v317, %v1460
    %v1462 = vpop.f32.mrf.mxu0
    %v1463 = vadd.f32 %v317, %v1462
    %1464 = vdwg.mxu0
    %1465 = vmatpush.bf16.msra.mxu0 %v961
    %1466 = vmatpush.bf16.msra.mxu0 %v957
    %1467 = vmatpush.bf16.msra.mxu0 %v953
    %1468 = vmatpush.bf16.msra.mxu0 %v949
    %1469 = vmatpush.bf16.msra.mxu0 %v945
    %1470 = vmatpush.bf16.msra.mxu0 %v941
    %1471 = vmatpush.bf16.msra.mxu0 %v937
    %1472 = vmatpush.bf16.msra.mxu0 %v933
    %1473 = vmatmul.bf16.gmra.mxu0 %v116
    %v1474 = vpop.f32.mrf.mxu0
    %v1475 = vadd.f32 %v1461, %v1474
    %v1476 = vpop.f32.mrf.mxu0
    %v1477 = vadd.f32 %v1463, %v1476
    %1478 = vdwg.mxu0
    %1479 = vmatpush.bf16.msra.mxu0 %v993
    %1480 = vmatpush.bf16.msra.mxu0 %v989
    %1481 = vmatpush.bf16.msra.mxu0 %v985
    %1482 = vmatpush.bf16.msra.mxu0 %v981
    %1483 = vmatpush.bf16.msra.mxu0 %v977
    %1484 = vmatpush.bf16.msra.mxu0 %v973
    %1485 = vmatpush.bf16.msra.mxu0 %v969
    %1486 = vmatpush.bf16.msra.mxu0 %v965
    %1487 = vmatmul.bf16.gmra.mxu0 %v117
    %v1488 = vpop.f32.mrf.mxu0
    %v1489 = vadd.f32 %v1475, %v1488
    %v1490 = vpop.f32.mrf.mxu0
    %v1491 = vadd.f32 %v1477, %v1490
    %1492 = vdwg.mxu0
    %1493 = vmatpush.bf16.msra.mxu0 %v1025
    %1494 = vmatpush.bf16.msra.mxu0 %v1021
    %1495 = vmatpush.bf16.msra.mxu0 %v1017
    %1496 = vmatpush.bf16.msra.mxu0 %v1013
    %1497 = vmatpush.bf16.msra.mxu0 %v1009
    %1498 = vmatpush.bf16.msra.mxu0 %v1005
    %1499 = vmatpush.bf16.msra.mxu0 %v1001
    %1500 = vmatpush.bf16.msra.mxu0 %v997
    %1501 = vmatmul.bf16.gmra.mxu0 %v118
    %v1502 = vpop.f32.mrf.mxu0
    %v1503 = vadd.f32 %v1489, %v1502
    %v1504 = vpop.f32.mrf.mxu0
    %v1505 = vadd.f32 %v1491, %v1504
    %1506 = vdwg.mxu0
    %1507 = vmatpush.bf16.msra.mxu0 %v1057
    %1508 = vmatpush.bf16.msra.mxu0 %v1053
    %1509 = vmatpush.bf16.msra.mxu0 %v1049
    %1510 = vmatpush.bf16.msra.mxu0 %v1045
    %1511 = vmatpush.bf16.msra.mxu0 %v1041
    %1512 = vmatpush.bf16.msra.mxu0 %v1037
    %1513 = vmatpush.bf16.msra.mxu0 %v1033
    %1514 = vmatpush.bf16.msra.mxu0 %v1029
    %1515 = vmatmul.bf16.gmra.mxu0 %v119
    %v1516 = vpop.f32.mrf.mxu0
    %v1517 = vadd.f32 %v1503, %v1516
    %v1518 = vpop.f32.mrf.mxu0
    %v1519 = vadd.f32 %v1505, %v1518
    %1520 = vdwg.mxu0
    %1521 = vmatpush.bf16.msra.mxu0 %v1089
    %1522 = vmatpush.bf16.msra.mxu0 %v1085
    %1523 = vmatpush.bf16.msra.mxu0 %v1081
    %1524 = vmatpush.bf16.msra.mxu0 %v1077
    %1525 = vmatpush.bf16.msra.mxu0 %v1073
    %1526 = vmatpush.bf16.msra.mxu0 %v1069
    %1527 = vmatpush.bf16.msra.mxu0 %v1065
    %1528 = vmatpush.bf16.msra.mxu0 %v1061
    %1529 = vmatmul.bf16.gmra.mxu0 %v120
    %v1530 = vpop.f32.mrf.mxu0
    %v1531 = vadd.f32 %v1517, %v1530
    %v1532 = vpop.f32.mrf.mxu0
    %v1533 = vadd.f32 %v1519, %v1532
    %1534 = vdwg.mxu0
    %1535 = vmatpush.bf16.msra.mxu0 %v930
    %1536 = vmatpush.bf16.msra.mxu0 %v926
    %1537 = vmatpush.bf16.msra.mxu0 %v922
    %1538 = vmatpush.bf16.msra.mxu0 %v918
    %1539 = vmatpush.bf16.msra.mxu0 %v914
    %1540 = vmatpush.bf16.msra.mxu0 %v910
    %1541 = vmatpush.bf16.msra.mxu0 %v906
    %1542 = vmatpush.bf16.msra.mxu0 %v902
    %1543 = vmatmul.bf16.gmra.mxu0 %v115
    %v1544 = vpop.f32.mrf.mxu0
    %v1545 = vadd.f32 %v318, %v1544
    %v1546 = vpop.f32.mrf.mxu0
    %v1547 = vadd.f32 %v318, %v1546
    %1548 = vdwg.mxu0
    %1549 = vmatpush.bf16.msra.mxu0 %v962
    %1550 = vmatpush.bf16.msra.mxu0 %v958
    %1551 = vmatpush.bf16.msra.mxu0 %v954
    %1552 = vmatpush.bf16.msra.mxu0 %v950
    %1553 = vmatpush.bf16.msra.mxu0 %v946
    %1554 = vmatpush.bf16.msra.mxu0 %v942
    %1555 = vmatpush.bf16.msra.mxu0 %v938
    %1556 = vmatpush.bf16.msra.mxu0 %v934
    %1557 = vmatmul.bf16.gmra.mxu0 %v116
    %v1558 = vpop.f32.mrf.mxu0
    %v1559 = vadd.f32 %v1545, %v1558
    %v1560 = vpop.f32.mrf.mxu0
    %v1561 = vadd.f32 %v1547, %v1560
    %1562 = vdwg.mxu0
    %1563 = vmatpush.bf16.msra.mxu0 %v994
    %1564 = vmatpush.bf16.msra.mxu0 %v990
    %1565 = vmatpush.bf16.msra.mxu0 %v986
    %1566 = vmatpush.bf16.msra.mxu0 %v982
    %1567 = vmatpush.bf16.msra.mxu0 %v978
    %1568 = vmatpush.bf16.msra.mxu0 %v974
    %1569 = vmatpush.bf16.msra.mxu0 %v970
    %1570 = vmatpush.bf16.msra.mxu0 %v966
    %1571 = vmatmul.bf16.gmra.mxu0 %v117
    %v1572 = vpop.f32.mrf.mxu0
    %v1573 = vadd.f32 %v1559, %v1572
    %v1574 = vpop.f32.mrf.mxu0
    %v1575 = vadd.f32 %v1561, %v1574
    %1576 = vdwg.mxu0
    %1577 = vmatpush.bf16.msra.mxu0 %v1026
    %1578 = vmatpush.bf16.msra.mxu0 %v1022
    %1579 = vmatpush.bf16.msra.mxu0 %v1018
    %1580 = vmatpush.bf16.msra.mxu0 %v1014
    %1581 = vmatpush.bf16.msra.mxu0 %v1010
    %1582 = vmatpush.bf16.msra.mxu0 %v1006
    %1583 = vmatpush.bf16.msra.mxu0 %v1002
    %1584 = vmatpush.bf16.msra.mxu0 %v998
    %1585 = vmatmul.bf16.gmra.mxu0 %v118
    %v1586 = vpop.f32.mrf.mxu0
    %v1587 = vadd.f32 %v1573, %v1586
    %v1588 = vpop.f32.mrf.mxu0
    %v1589 = vadd.f32 %v1575, %v1588
    %1590 = vdwg.mxu0
    %1591 = vmatpush.bf16.msra.mxu0 %v1058
    %1592 = vmatpush.bf16.msra.mxu0 %v1054
    %1593 = vmatpush.bf16.msra.mxu0 %v1050
    %1594 = vmatpush.bf16.msra.mxu0 %v1046
    %1595 = vmatpush.bf16.msra.mxu0 %v1042
    %1596 = vmatpush.bf16.msra.mxu0 %v1038
    %1597 = vmatpush.bf16.msra.mxu0 %v1034
    %1598 = vmatpush.bf16.msra.mxu0 %v1030
    %1599 = vmatmul.bf16.gmra.mxu0 %v119
    %v1600 = vpop.f32.mrf.mxu0
    %v1601 = vadd.f32 %v1587, %v1600
    %v1602 = vpop.f32.mrf.mxu0
    %v1603 = vadd.f32 %v1589, %v1602
    %1604 = vdwg.mxu0
    %1605 = vmatpush.bf16.msra.mxu0 %v1090
    %1606 = vmatpush.bf16.msra.mxu0 %v1086
    %1607 = vmatpush.bf16.msra.mxu0 %v1082
    %1608 = vmatpush.bf16.msra.mxu0 %v1078
    %1609 = vmatpush.bf16.msra.mxu0 %v1074
    %1610 = vmatpush.bf16.msra.mxu0 %v1070
    %1611 = vmatpush.bf16.msra.mxu0 %v1066
    %1612 = vmatpush.bf16.msra.mxu0 %v1062
    %1613 = vmatmul.bf16.gmra.mxu0 %v120
    %v1614 = vpop.f32.mrf.mxu0
    %v1615 = vadd.f32 %v1601, %v1614
    %v1616 = vpop.f32.mrf.mxu0
    %v1617 = vadd.f32 %v1603, %v1616
    %1618 = vdwg.mxu0
    %v1619 = vmax.f32 %v1363, 0.0
    %v1620 = vmax.f32 %v1447, 0.0
    %v1621 = vmax.f32 %v1531, 0.0
    %v1622 = vmax.f32 %v1615, 0.0
    %v1623 = vmax.f32 %v1365, 0.0
    %v1624 = vmax.f32 %v1449, 0.0
    %v1625 = vmax.f32 %v1533, 0.0
    %v1626 = vmax.f32 %v1617, 0.0
    %v1627 = vpack.c.bf16 %v1623, %v1619
    %v1628 = vpack.c.bf16 %v1624, %v1620
    %v1629 = vpack.c.bf16 %v1625, %v1621
    %v1630 = vpack.c.bf16 %v1626, %v1622
    %v1631 = vld [vmem:[#allocation8] sm:$0xff]
    %v1632 = vld [vmem:[#allocation8 + $0x8] sm:$0xff]
    %v1633 = vld [vmem:[#allocation8 + $0x10] sm:$0xff]
    %v1634 = vld [vmem:[#allocation8 + $0x18] sm:$0xff]
    %v1635 = vld [vmem:[#allocation8 + $0x20] sm:$0xff]
    %v1636 = vld [vmem:[#allocation8 + $0x28] sm:$0xff]
    %v1637 = vld [vmem:[#allocation8 + $0x30] sm:$0xff]
    %v1638 = vld [vmem:[#allocation8 + $0x38] sm:$0xff]
    %v1639 = vld [vmem:[#allocation8 + $0x40] sm:$0xff]
    %v1640 = vld [vmem:[#allocation8 + $0x48] sm:$0xff]
    %v1641 = vld [vmem:[#allocation8 + $0x50] sm:$0xff]
    %v1642 = vld [vmem:[#allocation8 + $0x58] sm:$0xff]
    %v1643 = vld [vmem:[#allocation8 + $0x60] sm:$0xff]
    %v1644 = vld [vmem:[#allocation8 + $0x68] sm:$0xff]
    %v1645 = vld [vmem:[#allocation8 + $0x70] sm:$0xff]
    %v1646 = vld [vmem:[#allocation8 + $0x78] sm:$0xff]
    %v1647 = vld [vmem:[#allocation8 + $0x80] sm:$0xff]
    %v1648 = vld [vmem:[#allocation8 + $0x88] sm:$0xff]
    %v1649 = vld [vmem:[#allocation8 + $0x90] sm:$0xff]
    %v1650 = vld [vmem:[#allocation8 + $0x98] sm:$0xff]
    %v1651 = vld [vmem:[#allocation8 + $0xa0] sm:$0xff]
    %v1652 = vld [vmem:[#allocation8 + $0xa8] sm:$0xff]
    %v1653 = vld [vmem:[#allocation8 + $0xb0] sm:$0xff]
    %v1654 = vld [vmem:[#allocation8 + $0xb8] sm:$0xff]
    %v1655 = vld [vmem:[#allocation8 + $0xc0] sm:$0xff]
    %v1656 = vld [vmem:[#allocation8 + $0xc8] sm:$0xff]
    %v1657 = vld [vmem:[#allocation8 + $0xd0] sm:$0xff]
    %v1658 = vld [vmem:[#allocation8 + $0xd8] sm:$0xff]
    %v1659 = vld [vmem:[#allocation8 + $0xe0] sm:$0xff]
    %v1660 = vld [vmem:[#allocation8 + $0xe8] sm:$0xff]
    %v1661 = vld [vmem:[#allocation8 + $0xf0] sm:$0xff]
    %v1662 = vld [vmem:[#allocation8 + $0xf8] sm:$0xff]
    %v1663 = vld [vmem:[#allocation8 + $0x100] sm:$0xff]
    %v1664 = vld [vmem:[#allocation8 + $0x108] sm:$0xff]
    %v1665 = vld [vmem:[#allocation8 + $0x110] sm:$0xff]
    %v1666 = vld [vmem:[#allocation8 + $0x118] sm:$0xff]
    %v1667 = vld [vmem:[#allocation8 + $0x120] sm:$0xff]
    %v1668 = vld [vmem:[#allocation8 + $0x128] sm:$0xff]
    %v1669 = vld [vmem:[#allocation8 + $0x130] sm:$0xff]
    %v1670 = vld [vmem:[#allocation8 + $0x138] sm:$0xff]
    %v1671 = vld [vmem:[#allocation8 + $0x140] sm:$0xff]
    %v1672 = vld [vmem:[#allocation8 + $0x148] sm:$0xff]
    %v1673 = vld [vmem:[#allocation8 + $0x150] sm:$0xff]
    %v1674 = vld [vmem:[#allocation8 + $0x158] sm:$0xff]
    %v1675 = vld [vmem:[#allocation8 + $0x160] sm:$0xff]
    %v1676 = vld [vmem:[#allocation8 + $0x168] sm:$0xff]
    %v1677 = vld [vmem:[#allocation8 + $0x170] sm:$0xff]
    %v1678 = vld [vmem:[#allocation8 + $0x178] sm:$0xff]
    %v1679 = vld [vmem:[#allocation8 + $0x180] sm:$0xff]
    %v1680 = vld [vmem:[#allocation8 + $0x188] sm:$0xff]
    %v1681 = vld [vmem:[#allocation8 + $0x190] sm:$0xff]
    %v1682 = vld [vmem:[#allocation8 + $0x198] sm:$0xff]
    %v1683 = vld [vmem:[#allocation8 + $0x1a0] sm:$0xff]
    %v1684 = vld [vmem:[#allocation8 + $0x1a8] sm:$0xff]
    %v1685 = vld [vmem:[#allocation8 + $0x1b0] sm:$0xff]
    %v1686 = vld [vmem:[#allocation8 + $0x1b8] sm:$0xff]
    %v1687 = vld [vmem:[#allocation8 + $0x1c0] sm:$0xff]
    %v1688 = vld [vmem:[#allocation8 + $0x1c8] sm:$0xff]
    %v1689 = vld [vmem:[#allocation8 + $0x1d0] sm:$0xff]
    %v1690 = vld [vmem:[#allocation8 + $0x1d8] sm:$0xff]
    %v1691 = vld [vmem:[#allocation8 + $0x1e0] sm:$0xff]
    %v1692 = vld [vmem:[#allocation8 + $0x1e8] sm:$0xff]
    %v1693 = vld [vmem:[#allocation8 + $0x1f0] sm:$0xff]
    %v1694 = vld [vmem:[#allocation8 + $0x1f8] sm:$0xff]
    %v1695 = vld [vmem:[%s4] sm:$0x3]
    %v1697 = vperm.slane %v1695, 0
    %v1698 = vperm.slane %v1695, 1
    %v1765 = vunpack.c.l.b16 %v1631
    %v1766 = vunpack.c.h.b16 %v1631
    %v1767 = vunpack.c.l.b16 %v1632
    %v1768 = vunpack.c.h.b16 %v1632
    %v1769 = vunpack.c.l.b16 %v1633
    %v1770 = vunpack.c.h.b16 %v1633
    %v1771 = vunpack.c.l.b16 %v1634
    %v1772 = vunpack.c.h.b16 %v1634
    %v1773 = vunpack.c.l.b16 %v1635
    %v1774 = vunpack.c.h.b16 %v1635
    %v1775 = vunpack.c.l.b16 %v1636
    %v1776 = vunpack.c.h.b16 %v1636
    %v1777 = vunpack.c.l.b16 %v1637
    %v1778 = vunpack.c.h.b16 %v1637
    %v1779 = vunpack.c.l.b16 %v1638
    %v1780 = vunpack.c.h.b16 %v1638
    %v1781 = vunpack.c.l.b16 %v1639
    %v1782 = vunpack.c.h.b16 %v1639
    %v1783 = vunpack.c.l.b16 %v1640
    %v1784 = vunpack.c.h.b16 %v1640
    %v1785 = vunpack.c.l.b16 %v1641
    %v1786 = vunpack.c.h.b16 %v1641
    %v1787 = vunpack.c.l.b16 %v1642
    %v1788 = vunpack.c.h.b16 %v1642
    %v1789 = vunpack.c.l.b16 %v1643
    %v1790 = vunpack.c.h.b16 %v1643
    %v1791 = vunpack.c.l.b16 %v1644
    %v1792 = vunpack.c.h.b16 %v1644
    %v1793 = vunpack.c.l.b16 %v1645
    %v1794 = vunpack.c.h.b16 %v1645
    %v1795 = vunpack.c.l.b16 %v1646
    %v1796 = vunpack.c.h.b16 %v1646
    %v1797 = vunpack.c.l.b16 %v1647
    %v1798 = vunpack.c.h.b16 %v1647
    %v1799 = vunpack.c.l.b16 %v1648
    %v1800 = vunpack.c.h.b16 %v1648
    %v1801 = vunpack.c.l.b16 %v1649
    %v1802 = vunpack.c.h.b16 %v1649
    %v1803 = vunpack.c.l.b16 %v1650
    %v1804 = vunpack.c.h.b16 %v1650
    %v1805 = vunpack.c.l.b16 %v1651
    %v1806 = vunpack.c.h.b16 %v1651
    %v1807 = vunpack.c.l.b16 %v1652
    %v1808 = vunpack.c.h.b16 %v1652
    %v1809 = vunpack.c.l.b16 %v1653
    %v1810 = vunpack.c.h.b16 %v1653
    %v1811 = vunpack.c.l.b16 %v1654
    %v1812 = vunpack.c.h.b16 %v1654
    %v1813 = vunpack.c.l.b16 %v1655
    %v1814 = vunpack.c.h.b16 %v1655
    %v1815 = vunpack.c.l.b16 %v1656
    %v1816 = vunpack.c.h.b16 %v1656
    %v1817 = vunpack.c.l.b16 %v1657
    %v1818 = vunpack.c.h.b16 %v1657
    %v1819 = vunpack.c.l.b16 %v1658
    %v1820 = vunpack.c.h.b16 %v1658
    %v1821 = vunpack.c.l.b16 %v1659
    %v1822 = vunpack.c.h.b16 %v1659
    %v1823 = vunpack.c.l.b16 %v1660
    %v1824 = vunpack.c.h.b16 %v1660
    %v1825 = vunpack.c.l.b16 %v1661
    %v1826 = vunpack.c.h.b16 %v1661
    %v1827 = vunpack.c.l.b16 %v1662
    %v1828 = vunpack.c.h.b16 %v1662
    %v1829 = vunpack.c.l.b16 %v1663
    %v1830 = vunpack.c.h.b16 %v1663
    %v1831 = vunpack.c.l.b16 %v1664
    %v1832 = vunpack.c.h.b16 %v1664
    %v1833 = vunpack.c.l.b16 %v1665
    %v1834 = vunpack.c.h.b16 %v1665
    %v1835 = vunpack.c.l.b16 %v1666
    %v1836 = vunpack.c.h.b16 %v1666
    %v1837 = vunpack.c.l.b16 %v1667
    %v1838 = vunpack.c.h.b16 %v1667
    %v1839 = vunpack.c.l.b16 %v1668
    %v1840 = vunpack.c.h.b16 %v1668
    %v1841 = vunpack.c.l.b16 %v1669
    %v1842 = vunpack.c.h.b16 %v1669
    %v1843 = vunpack.c.l.b16 %v1670
    %v1844 = vunpack.c.h.b16 %v1670
    %v1845 = vunpack.c.l.b16 %v1671
    %v1846 = vunpack.c.h.b16 %v1671
    %v1847 = vunpack.c.l.b16 %v1672
    %v1848 = vunpack.c.h.b16 %v1672
    %v1849 = vunpack.c.l.b16 %v1673
    %v1850 = vunpack.c.h.b16 %v1673
    %v1851 = vunpack.c.l.b16 %v1674
    %v1852 = vunpack.c.h.b16 %v1674
    %v1853 = vunpack.c.l.b16 %v1675
    %v1854 = vunpack.c.h.b16 %v1675
    %v1855 = vunpack.c.l.b16 %v1676
    %v1856 = vunpack.c.h.b16 %v1676
    %v1857 = vunpack.c.l.b16 %v1677
    %v1858 = vunpack.c.h.b16 %v1677
    %v1859 = vunpack.c.l.b16 %v1678
    %v1860 = vunpack.c.h.b16 %v1678
    %v1861 = vunpack.c.l.b16 %v1679
    %v1862 = vunpack.c.h.b16 %v1679
    %v1863 = vunpack.c.l.b16 %v1680
    %v1864 = vunpack.c.h.b16 %v1680
    %v1865 = vunpack.c.l.b16 %v1681
    %v1866 = vunpack.c.h.b16 %v1681
    %v1867 = vunpack.c.l.b16 %v1682
    %v1868 = vunpack.c.h.b16 %v1682
    %v1869 = vunpack.c.l.b16 %v1683
    %v1870 = vunpack.c.h.b16 %v1683
    %v1871 = vunpack.c.l.b16 %v1684
    %v1872 = vunpack.c.h.b16 %v1684
    %v1873 = vunpack.c.l.b16 %v1685
    %v1874 = vunpack.c.h.b16 %v1685
    %v1875 = vunpack.c.l.b16 %v1686
    %v1876 = vunpack.c.h.b16 %v1686
    %v1877 = vunpack.c.l.b16 %v1687
    %v1878 = vunpack.c.h.b16 %v1687
    %v1879 = vunpack.c.l.b16 %v1688
    %v1880 = vunpack.c.h.b16 %v1688
    %v1881 = vunpack.c.l.b16 %v1689
    %v1882 = vunpack.c.h.b16 %v1689
    %v1883 = vunpack.c.l.b16 %v1690
    %v1884 = vunpack.c.h.b16 %v1690
    %v1885 = vunpack.c.l.b16 %v1691
    %v1886 = vunpack.c.h.b16 %v1691
    %v1887 = vunpack.c.l.b16 %v1692
    %v1888 = vunpack.c.h.b16 %v1692
    %v1889 = vunpack.c.l.b16 %v1693
    %v1890 = vunpack.c.h.b16 %v1693
    %v1891 = vunpack.c.l.b16 %v1694
    %v1892 = vunpack.c.h.b16 %v1694
    %v1893 = vpack.c.b16 %v1767, %v1765
    %v1894 = vpack.c.b16 %v1768, %v1766
    %v1895 = vpack.c.b16 %v1771, %v1769
    %v1896 = vpack.c.b16 %v1772, %v1770
    %v1897 = vpack.c.b16 %v1775, %v1773
    %v1898 = vpack.c.b16 %v1776, %v1774
    %v1899 = vpack.c.b16 %v1779, %v1777
    %v1900 = vpack.c.b16 %v1780, %v1778
    %v1901 = vpack.c.b16 %v1783, %v1781
    %v1902 = vpack.c.b16 %v1784, %v1782
    %v1903 = vpack.c.b16 %v1787, %v1785
    %v1904 = vpack.c.b16 %v1788, %v1786
    %v1905 = vpack.c.b16 %v1791, %v1789
    %v1906 = vpack.c.b16 %v1792, %v1790
    %v1907 = vpack.c.b16 %v1795, %v1793
    %v1908 = vpack.c.b16 %v1796, %v1794
    %v1909 = vpack.c.b16 %v1799, %v1797
    %v1910 = vpack.c.b16 %v1800, %v1798
    %v1911 = vpack.c.b16 %v1803, %v1801
    %v1912 = vpack.c.b16 %v1804, %v1802
    %v1913 = vpack.c.b16 %v1807, %v1805
    %v1914 = vpack.c.b16 %v1808, %v1806
    %v1915 = vpack.c.b16 %v1811, %v1809
    %v1916 = vpack.c.b16 %v1812, %v1810
    %v1917 = vpack.c.b16 %v1815, %v1813
    %v1918 = vpack.c.b16 %v1816, %v1814
    %v1919 = vpack.c.b16 %v1819, %v1817
    %v1920 = vpack.c.b16 %v1820, %v1818
    %v1921 = vpack.c.b16 %v1823, %v1821
    %v1922 = vpack.c.b16 %v1824, %v1822
    %v1923 = vpack.c.b16 %v1827, %v1825
    %v1924 = vpack.c.b16 %v1828, %v1826
    %v1925 = vpack.c.b16 %v1831, %v1829
    %v1926 = vpack.c.b16 %v1832, %v1830
    %v1927 = vpack.c.b16 %v1835, %v1833
    %v1928 = vpack.c.b16 %v1836, %v1834
    %v1929 = vpack.c.b16 %v1839, %v1837
    %v1930 = vpack.c.b16 %v1840, %v1838
    %v1931 = vpack.c.b16 %v1843, %v1841
    %v1932 = vpack.c.b16 %v1844, %v1842
    %v1933 = vpack.c.b16 %v1847, %v1845
    %v1934 = vpack.c.b16 %v1848, %v1846
    %v1935 = vpack.c.b16 %v1851, %v1849
    %v1936 = vpack.c.b16 %v1852, %v1850
    %v1937 = vpack.c.b16 %v1855, %v1853
    %v1938 = vpack.c.b16 %v1856, %v1854
    %v1939 = vpack.c.b16 %v1859, %v1857
    %v1940 = vpack.c.b16 %v1860, %v1858
    %v1941 = vpack.c.b16 %v1863, %v1861
    %v1942 = vpack.c.b16 %v1864, %v1862
    %v1943 = vpack.c.b16 %v1867, %v1865
    %v1944 = vpack.c.b16 %v1868, %v1866
    %v1945 = vpack.c.b16 %v1871, %v1869
    %v1946 = vpack.c.b16 %v1872, %v1870
    %v1947 = vpack.c.b16 %v1875, %v1873
    %v1948 = vpack.c.b16 %v1876, %v1874
    %v1949 = vpack.c.b16 %v1879, %v1877
    %v1950 = vpack.c.b16 %v1880, %v1878
    %v1951 = vpack.c.b16 %v1883, %v1881
    %v1952 = vpack.c.b16 %v1884, %v1882
    %v1953 = vpack.c.b16 %v1887, %v1885
    %v1954 = vpack.c.b16 %v1888, %v1886
    %v1955 = vpack.c.b16 %v1891, %v1889
    %v1956 = vpack.c.b16 %v1892, %v1890
    %2021 = vmatpush.bf16.msra.mxu0 %v1907
    %2022 = vmatpush.bf16.msra.mxu0 %v1905
    %2023 = vmatpush.bf16.msra.mxu0 %v1903
    %2024 = vmatpush.bf16.msra.mxu0 %v1901
    %2025 = vmatpush.bf16.msra.mxu0 %v1899
    %2026 = vmatpush.bf16.msra.mxu0 %v1897
    %2027 = vmatpush.bf16.msra.mxu0 %v1895
    %2028 = vmatpush.bf16.msra.mxu0 %v1893
    %2029 = vmatmul.bf16.gmra.mxu0 %v1627
    %v2030 = vpop.f32.mrf.mxu0
    %v2031 = vadd.f32 %v1697, %v2030
    %v2032 = vpop.f32.mrf.mxu0
    %v2033 = vadd.f32 %v1697, %v2032
    %2034 = vdwg.mxu0
    %2035 = vmatpush.bf16.msra.mxu0 %v1923
    %2036 = vmatpush.bf16.msra.mxu0 %v1921
    %2037 = vmatpush.bf16.msra.mxu0 %v1919
    %2038 = vmatpush.bf16.msra.mxu0 %v1917
    %2039 = vmatpush.bf16.msra.mxu0 %v1915
    %2040 = vmatpush.bf16.msra.mxu0 %v1913
    %2041 = vmatpush.bf16.msra.mxu0 %v1911
    %2042 = vmatpush.bf16.msra.mxu0 %v1909
    %2043 = vmatmul.bf16.gmra.mxu0 %v1628
    %v2044 = vpop.f32.mrf.mxu0
    %v2045 = vadd.f32 %v2031, %v2044
    %v2046 = vpop.f32.mrf.mxu0
    %v2047 = vadd.f32 %v2033, %v2046
    %2048 = vdwg.mxu0
    %2049 = vmatpush.bf16.msra.mxu0 %v1939
    %2050 = vmatpush.bf16.msra.mxu0 %v1937
    %2051 = vmatpush.bf16.msra.mxu0 %v1935
    %2052 = vmatpush.bf16.msra.mxu0 %v1933
    %2053 = vmatpush.bf16.msra.mxu0 %v1931
    %2054 = vmatpush.bf16.msra.mxu0 %v1929
    %2055 = vmatpush.bf16.msra.mxu0 %v1927
    %2056 = vmatpush.bf16.msra.mxu0 %v1925
    %2057 = vmatmul.bf16.gmra.mxu0 %v1629
    %v2058 = vpop.f32.mrf.mxu0
    %v2059 = vadd.f32 %v2045, %v2058
    %v2060 = vpop.f32.mrf.mxu0
    %v2061 = vadd.f32 %v2047, %v2060
    %2062 = vdwg.mxu0
    %2063 = vmatpush.bf16.msra.mxu0 %v1955
    %2064 = vmatpush.bf16.msra.mxu0 %v1953
    %2065 = vmatpush.bf16.msra.mxu0 %v1951
    %2066 = vmatpush.bf16.msra.mxu0 %v1949
    %2067 = vmatpush.bf16.msra.mxu0 %v1947
    %2068 = vmatpush.bf16.msra.mxu0 %v1945
    %2069 = vmatpush.bf16.msra.mxu0 %v1943
    %2070 = vmatpush.bf16.msra.mxu0 %v1941
    %2071 = vmatmul.bf16.gmra.mxu0 %v1630
    %v2072 = vpop.f32.mrf.mxu0
    %v2073 = vadd.f32 %v2059, %v2072
    %v2074 = vpop.f32.mrf.mxu0
    %v2075 = vadd.f32 %v2061, %v2074
    %2076 = vdwg.mxu0
    %2077 = vmatpush.bf16.msra.mxu0 %v1908
    %2078 = vmatpush.bf16.msra.mxu0 %v1906
    %2079 = vmatpush.bf16.msra.mxu0 %v1904
    %2080 = vmatpush.bf16.msra.mxu0 %v1902
    %2081 = vmatpush.bf16.msra.mxu0 %v1900
    %2082 = vmatpush.bf16.msra.mxu0 %v1898
    %2083 = vmatpush.bf16.msra.mxu0 %v1896
    %2084 = vmatpush.bf16.msra.mxu0 %v1894
    %2085 = vmatmul.bf16.gmra.mxu0 %v1627
    %v2086 = vpop.f32.mrf.mxu0
    %v2087 = vadd.f32 %v1698, %v2086
    %v2088 = vpop.f32.mrf.mxu0
    %v2089 = vadd.f32 %v1698, %v2088
    %2090 = vdwg.mxu0
    %2091 = vmatpush.bf16.msra.mxu0 %v1924
    %2092 = vmatpush.bf16.msra.mxu0 %v1922
    %2093 = vmatpush.bf16.msra.mxu0 %v1920
    %2094 = vmatpush.bf16.msra.mxu0 %v1918
    %2095 = vmatpush.bf16.msra.mxu0 %v1916
    %2096 = vmatpush.bf16.msra.mxu0 %v1914
    %2097 = vmatpush.bf16.msra.mxu0 %v1912
    %2098 = vmatpush.bf16.msra.mxu0 %v1910
    %2099 = vmatmul.bf16.gmra.mxu0 %v1628
    %v2100 = vpop.f32.mrf.mxu0
    %v2101 = vadd.f32 %v2087, %v2100
    %v2102 = vpop.f32.mrf.mxu0
    %v2103 = vadd.f32 %v2089, %v2102
    %2104 = vdwg.mxu0
    %2105 = vmatpush.bf16.msra.mxu0 %v1940
    %2106 = vmatpush.bf16.msra.mxu0 %v1938
    %2107 = vmatpush.bf16.msra.mxu0 %v1936
    %2108 = vmatpush.bf16.msra.mxu0 %v1934
    %2109 = vmatpush.bf16.msra.mxu0 %v1932
    %2110 = vmatpush.bf16.msra.mxu0 %v1930
    %2111 = vmatpush.bf16.msra.mxu0 %v1928
    %2112 = vmatpush.bf16.msra.mxu0 %v1926
    %2113 = vmatmul.bf16.gmra.mxu0 %v1629
    %v2114 = vpop.f32.mrf.mxu0
    %v2115 = vadd.f32 %v2101, %v2114
    %v2116 = vpop.f32.mrf.mxu0
    %v2117 = vadd.f32 %v2103, %v2116
    %2118 = vdwg.mxu0
    %2119 = vmatpush.bf16.msra.mxu0 %v1956
    %2120 = vmatpush.bf16.msra.mxu0 %v1954
    %2121 = vmatpush.bf16.msra.mxu0 %v1952
    %2122 = vmatpush.bf16.msra.mxu0 %v1950
    %2123 = vmatpush.bf16.msra.mxu0 %v1948
    %2124 = vmatpush.bf16.msra.mxu0 %v1946
    %2125 = vmatpush.bf16.msra.mxu0 %v1944
    %2126 = vmatpush.bf16.msra.mxu0 %v1942
    %2127 = vmatmul.bf16.gmra.mxu0 %v1630
    %v2128 = vpop.f32.mrf.mxu0
    %v2129 = vadd.f32 %v2115, %v2128
    %v2130 = vpop.f32.mrf.mxu0
    %v2131 = vadd.f32 %v2117, %v2130
    %2132 = vdwg.mxu0
    %v2133 = vmax.f32 %v2073, 0.0
    %v2134 = vmax.f32 %v2129, 0.0
    %v2135 = vmax.f32 %v2075, 0.0
    %v2136 = vmax.f32 %v2131, 0.0
    %v2137 = vpack.c.bf16 %v2135, %v2133
    %v2138 = vpack.c.bf16 %v2136, %v2134
    %v2139 = vld [vmem:[#allocation10] sm:$0xf]
    %v2140 = vld [vmem:[#allocation10 + $0x4] sm:$0xf]
    %v2141 = vld [vmem:[#allocation10 + $0x8] sm:$0xf]
    %v2142 = vld [vmem:[#allocation10 + $0xc] sm:$0xf]
    %v2143 = vld [vmem:[#allocation10 + $0x10] sm:$0xf]
    %v2144 = vld [vmem:[#allocation10 + $0x14] sm:$0xf]
    %v2145 = vld [vmem:[#allocation10 + $0x18] sm:$0xf]
    %v2146 = vld [vmem:[#allocation10 + $0x1c] sm:$0xf]
    %v2147 = vld [vmem:[#allocation10 + $0x20] sm:$0xf]
    %v2148 = vld [vmem:[#allocation10 + $0x24] sm:$0xf]
    %v2149 = vld [vmem:[#allocation10 + $0x28] sm:$0xf]
    %v2150 = vld [vmem:[#allocation10 + $0x2c] sm:$0xf]
    %v2151 = vld [vmem:[#allocation10 + $0x30] sm:$0xf]
    %v2152 = vld [vmem:[#allocation10 + $0x34] sm:$0xf]
    %v2153 = vld [vmem:[#allocation10 + $0x38] sm:$0xf]
    %v2154 = vld [vmem:[#allocation10 + $0x3c] sm:$0xf]
    %v2155 = vld [vmem:[#allocation10 + $0x40] sm:$0xf]
    %v2156 = vld [vmem:[#allocation10 + $0x44] sm:$0xf]
    %v2157 = vld [vmem:[#allocation10 + $0x48] sm:$0xf]
    %v2158 = vld [vmem:[#allocation10 + $0x4c] sm:$0xf]
    %v2159 = vld [vmem:[#allocation10 + $0x50] sm:$0xf]
    %v2160 = vld [vmem:[#allocation10 + $0x54] sm:$0xf]
    %v2161 = vld [vmem:[#allocation10 + $0x58] sm:$0xf]
    %v2162 = vld [vmem:[#allocation10 + $0x5c] sm:$0xf]
    %v2163 = vld [vmem:[#allocation10 + $0x60] sm:$0xf]
    %v2164 = vld [vmem:[#allocation10 + $0x64] sm:$0xf]
    %v2165 = vld [vmem:[#allocation10 + $0x68] sm:$0xf]
    %v2166 = vld [vmem:[#allocation10 + $0x6c] sm:$0xf]
    %v2167 = vld [vmem:[#allocation10 + $0x70] sm:$0xf]
    %v2168 = vld [vmem:[#allocation10 + $0x74] sm:$0xf]
    %v2169 = vld [vmem:[#allocation10 + $0x78] sm:$0xf]
    %v2170 = vld [vmem:[#allocation10 + $0x7c] sm:$0xf]
    %v2171 = vld [vmem:[%s6] sm:$0x1]
    %v2173 = vperm.slane %v2171, 0
    %v2207 = vunpack.c.l.b16 %v2139
    %v2208 = vunpack.c.l.b16 %v2140
    %v2209 = vunpack.c.l.b16 %v2141
    %v2210 = vunpack.c.l.b16 %v2142
    %v2211 = vunpack.c.l.b16 %v2143
    %v2212 = vunpack.c.l.b16 %v2144
    %v2213 = vunpack.c.l.b16 %v2145
    %v2214 = vunpack.c.l.b16 %v2146
    %v2215 = vunpack.c.l.b16 %v2147
    %v2216 = vunpack.c.l.b16 %v2148
    %v2217 = vunpack.c.l.b16 %v2149
    %v2218 = vunpack.c.l.b16 %v2150
    %v2219 = vunpack.c.l.b16 %v2151
    %v2220 = vunpack.c.l.b16 %v2152
    %v2221 = vunpack.c.l.b16 %v2153
    %v2222 = vunpack.c.l.b16 %v2154
    %v2223 = vunpack.c.l.b16 %v2155
    %v2224 = vunpack.c.l.b16 %v2156
    %v2225 = vunpack.c.l.b16 %v2157
    %v2226 = vunpack.c.l.b16 %v2158
    %v2227 = vunpack.c.l.b16 %v2159
    %v2228 = vunpack.c.l.b16 %v2160
    %v2229 = vunpack.c.l.b16 %v2161
    %v2230 = vunpack.c.l.b16 %v2162
    %v2231 = vunpack.c.l.b16 %v2163
    %v2232 = vunpack.c.l.b16 %v2164
    %v2233 = vunpack.c.l.b16 %v2165
    %v2234 = vunpack.c.l.b16 %v2166
    %v2235 = vunpack.c.l.b16 %v2167
    %v2236 = vunpack.c.l.b16 %v2168
    %v2237 = vunpack.c.l.b16 %v2169
    %v2238 = vunpack.c.l.b16 %v2170
    %v2239 = vpack.c.b16 %v2208, %v2207
    %v2240 = vpack.c.b16 %v2210, %v2209
    %v2241 = vpack.c.b16 %v2212, %v2211
    %v2242 = vpack.c.b16 %v2214, %v2213
    %v2243 = vpack.c.b16 %v2216, %v2215
    %v2244 = vpack.c.b16 %v2218, %v2217
    %v2245 = vpack.c.b16 %v2220, %v2219
    %v2246 = vpack.c.b16 %v2222, %v2221
    %v2247 = vpack.c.b16 %v2224, %v2223
    %v2248 = vpack.c.b16 %v2226, %v2225
    %v2249 = vpack.c.b16 %v2228, %v2227
    %v2250 = vpack.c.b16 %v2230, %v2229
    %v2251 = vpack.c.b16 %v2232, %v2231
    %v2252 = vpack.c.b16 %v2234, %v2233
    %v2253 = vpack.c.b16 %v2236, %v2235
    %v2254 = vpack.c.b16 %v2238, %v2237
    %2271 = vmatpush.bf16.msra.mxu0 %v2246
    %2272 = vmatpush.bf16.msra.mxu0 %v2245
    %2273 = vmatpush.bf16.msra.mxu0 %v2244
    %2274 = vmatpush.bf16.msra.mxu0 %v2243
    %2275 = vmatpush.bf16.msra.mxu0 %v2242
    %2276 = vmatpush.bf16.msra.mxu0 %v2241
    %2277 = vmatpush.bf16.msra.mxu0 %v2240
    %2278 = vmatpush.bf16.msra.mxu0 %v2239
    %2279 = vmatmul.bf16.gmra.mxu0 %v2137
    %v2280 = vpop.f32.mrf.mxu0
    %v2281 = vadd.f32 %v2173, %v2280
    %v2282 = vpop.f32.mrf.mxu0
    %v2283 = vadd.f32 %v2173, %v2282
    %2284 = vdwg.mxu0
    %2285 = vmatpush.bf16.msra.mxu0 %v2254
    %2286 = vmatpush.bf16.msra.mxu0 %v2253
    %2287 = vmatpush.bf16.msra.mxu0 %v2252
    %2288 = vmatpush.bf16.msra.mxu0 %v2251
    %2289 = vmatpush.bf16.msra.mxu0 %v2250
    %2290 = vmatpush.bf16.msra.mxu0 %v2249
    %2291 = vmatpush.bf16.msra.mxu0 %v2248
    %2292 = vmatpush.bf16.msra.mxu0 %v2247
    %2293 = vmatmul.bf16.gmra.mxu0 %v2138
    %v2294 = vpop.f32.mrf.mxu0
    %v2295 = vadd.f32 %v2281, %v2294
    %v2296 = vpop.f32.mrf.mxu0
    %v2297 = vadd.f32 %v2283, %v2296
    %2298 = vdwg.mxu0
    %2299 = vst [vmem:[#allocation11] sm:$0xff] %v2295
    %2300 = vst [vmem:[#allocation11 + $0x8] sm:$0xff] %v2297
    // Predicated region
    $region50: #{fcnet_forward.1} parent=1 // pred_check
      _
    $region51: #{fcnet_forward.1} parent=1 // pred_check_branch
      %2302 = sbr.rel (0) target = $region53
    $region52: #{fcnet_forward.1} parent=1 // pred_region
      %2304 = vsyncadd [#allocation4], 0
      %s2305 = sshll.u32 [#allocation11], 4
      %s2306 = int_to_ptr.vmem [resolvable:$true] %s2305
      %s2307 = sshll.u32 %s7, 4
      %s2308 = int_to_ptr.hbm [resolvable:$true] %s2307
      %2313 = dma.vmem_to_hbm [thread:$0]  %s2306, 256, %s2308, [#allocation4], 128, 128, 8
    $region53: #{fcnet_forward.1} parent=1 // pred_fallthru
      _
    // Predicated region
    $region54: #{fcnet_forward.1} parent=1 // pred_check
      _
    $region55: #{fcnet_forward.1} parent=1 // pred_check_branch
      %2315 = sbr.rel (0) target = $region57
    $region56: #{fcnet_forward.1} parent=1 // pred_region
      %2317 = dma.done [#allocation4], 256
    $region57: #{fcnet_forward.1} parent=1 // pred_fallthru
      _
    %2318 = vsyncpa [#allocation3], 1
    %2319 = vsyncpa [#allocation6], 1
    %2320 = vsyncpa [#allocation9], 1
    %2321 = vsyncpa [#allocation4], 1

</llo_original>
